<compile_context>
chip_gen: v6e
topology: v6e:2x2x1
jax: 0.10.0
libtpu: 0.0.40
codegen_flags: <defaults>
</compile_context>

<pallas_src>
import functools

import jax
import jax.numpy as jnp
from jax import lax
from jax.experimental import pallas as pl
from jax.experimental.pallas import tpu as pltpu

LRELU_SLOPE = 0.01
BN_EPS = 1e-5
K = 3            # kernel_size
PAD = K // 2


def _leaky(v):
    return jnp.where(v >= 0, v, LRELU_SLOPE * v)


def _vmem_limit_bytes():
    """Explicit scoped-VMEM limit: ~75% of physical, capped at 100 MiB."""
    try:
        cap = pltpu.get_tpu_info().vmem_capacity_bytes
    except Exception:
        cap = 64 * 1024 * 1024          # conservative (v7x-sized) fallback
    return int(min(cap * 3 // 4, 100 * 1024 * 1024))


def _pick_tile_h(N, H, W, Cs, Cd, budget_bytes):
    """Largest divisor of H whose per-step working set fits the budget; prefer >=2 strips."""
    def step_bytes(d):
        m = N * d * W
        slab = N * (d + 2 * PAD) * (W + 2 * PAD) * Cs * 2     # bf16 staged slab value
        lhs = m * K * Cs * 2                                  # per-kh im2col operand (bf16)
        acc = m * Cd * 4                                      # f32 accumulator
        io = 2 * N * d * W * (Cs * 4 + Cd * 4)                # double-buffered in/out blocks
        return slab + lhs + acc + io

    divs = [d for d in range(1, H + 1) if H % d == 0 and step_bytes(d) <= budget_bytes]
    if not divs:
        return 1
    multi = [d for d in divs if H // d >= 2]                  # keep >=2 strips for pipelining
    if multi and 4 * max(multi) >= max(divs):
        return max(multi)
    return max(divs)


def _conv_bn_stats_kernel(top_ref, src_ref, bot_ref, scale_ref, shift_ref,
                          w_ref, b_ref, y_ref, sum_ref, ssq_ref, *, apply_act):
    """3x3 SAME conv over one H-strip with fused per-strip BN statistics.

    top_ref/bot_ref : (N, 1, W, Cs)   1-row halos (clamped at edges; zeroed when unused)
    src_ref         : (N, TH, W, Cs)  main strip of the (un-normalized) source
    scale/shift     : (1, Cs) f32     BN-apply affine for the source (iff apply_act)
    w_ref           : (K, K*Cs, Cd)   bf16 conv weights, im2col layout per kh
    b_ref           : (1, Cd) f32     conv bias
    y_ref           : (N, TH, W, Cd)  conv output tile (pre-BN), bf16 in HBM
    sum_ref/ssq_ref : (1, 1, Cd) f32  per-strip partial sum / sum-of-squares
    """
    i = pl.program_id(0)
    n = pl.num_programs(0)
    N, TH, W, Cs = src_ref.shape
    Cd = y_ref.shape[-1]
    M = N * TH * W

    def stage(v):
        # Source staging in f32 (v5e VPU/EUP have no bf16); matmul operands cast later.
        v = v.astype(jnp.float32)
        if apply_act:
            v = _leaky(v * scale_ref[...] + shift_ref[...])
        return v

    main = stage(src_ref[...]).astype(jnp.bfloat16)
    top = jnp.where(i > 0, stage(top_ref[...]), 0.0).astype(jnp.bfloat16)
    bot = jnp.where(i < n - 1, stage(bot_ref[...]), 0.0).astype(jnp.bfloat16)

    rows = jnp.concatenate([top, main, bot], axis=1)                 # (N, TH+2, W, Cs)
    zcol = jnp.zeros((N, TH + 2 * PAD, PAD, Cs), jnp.bfloat16)
    slab = jnp.concatenate([zcol, rows, zcol], axis=2)               # (N, TH+2, W+2, Cs)

    # im2col grouped by kh: 3 accumulating MXU dots with contraction K*Cs each.
    acc = jnp.zeros((M, Cd), jnp.float32)
    for kh in range(K):
        taps = [slab[:, kh:kh + TH, kw:kw + W, :] for kw in range(K)]
        lhs = jnp.concatenate(taps, axis=-1).reshape(M, K * Cs)      # bf16 (M, K*Cs)
        acc = acc + jnp.dot(lhs, w_ref[kh], preferred_element_type=jnp.float32)
    y = acc + b_ref[...]                                             # f32 (M, Cd)

    y_ref[...] = y.reshape(N, TH, W, Cd).astype(y_ref.dtype)

    # Per-strip BN partial statistics in f32 (reduced in the wrapper).
    sum_ref[...] = jnp.sum(y, axis=0).reshape(1, 1, Cd)
    ssq_ref[...] = jnp.sum(y * y, axis=0).reshape(1, 1, Cd)


def _bn_act_kernel(y_ref, scale_ref, shift_ref, o_ref):
    """Final BN-apply + LeakyReLU, tiled over H-strips (f32 math, f32 output)."""
    v = y_ref[...].astype(jnp.float32)
    o_ref[...] = _leaky(v * scale_ref[...] + shift_ref[...])


def _bn_affine(s, q, count, gamma, beta):
    """Fold batch mean/var (training-mode BN, biased var) + gamma/beta into scale/shift."""
    mean = s / count
    var = jnp.maximum(q / count - mean * mean, 0.0)
    scale = gamma * lax.rsqrt(var + BN_EPS)
    shift = beta - mean * scale
    return scale, shift


def _conv_stage(src, scale, shift, wp, bp, apply_act, th, vmem_limit):
    """One conv (+bias) over H-strips with fused per-strip BN statistics."""
    N, H, W, Cs = src.shape
    Cd = wp.shape[-1]
    assert H % th == 0
    n_tiles = H // th
    vmem = pl.BlockSpec(memory_space=pltpu.MemorySpace.VMEM)
    kern = functools.partial(_conv_bn_stats_kernel, apply_act=apply_act)

    y, s, q = pl.pallas_call(
        kern,
        grid=(n_tiles,),
        in_specs=[
            # 1-row top halo (clamped at the first strip; zeroed in-kernel there)
            pl.BlockSpec((N, 1, W, Cs), lambda i: (0, jnp.maximum(i * th - 1, 0), 0, 0)),
            # main TH-row strip
            pl.BlockSpec((N, th, W, Cs), lambda i: (0, i, 0, 0)),
            # 1-row bottom halo (clamped at the last strip; zeroed in-kernel there)
            pl.BlockSpec((N, 1, W, Cs), lambda i: (0, jnp.minimum(i * th + th, H - 1), 0, 0)),
            vmem, vmem, vmem, vmem,
        ],
        out_specs=[
            pl.BlockSpec((N, th, W, Cd), lambda i: (0, i, 0, 0)),
            pl.BlockSpec((1, 1, Cd), lambda i: (i, 0, 0)),
            pl.BlockSpec((1, 1, Cd), lambda i: (i, 0, 0)),
        ],
        out_shape=[
            jax.ShapeDtypeStruct((N, H, W, Cd), jnp.bfloat16),       # bf16 intermediate
            jax.ShapeDtypeStruct((n_tiles, 1, Cd), jnp.float32),
            jax.ShapeDtypeStruct((n_tiles, 1, Cd), jnp.float32),
        ],
        compiler_params=pltpu.CompilerParams(
            dimension_semantics=("parallel",),
            vmem_limit_bytes=vmem_limit,
        ),
    )(src, src, src, scale, shift, wp, bp)

    return y, jnp.sum(s, axis=0), jnp.sum(q, axis=0)                 # (1, Cd) each


def double_conv_pallas(x_nchw, params, *, tile_h=None):
    """x_nchw: (N, Cin, H, W) float32 -> (N, Cout, H, W) float32."""
    w1, b1, g1, bt1, w2, b2, g2, bt2 = params
    N, Cin, H, W = x_nchw.shape
    Cmid = w1.shape[-1]
    Cout = w2.shape[-1]

    vmem_limit = _vmem_limit_bytes()
    budget = vmem_limit // 3

    x_nhwc = jnp.transpose(x_nchw, (0, 2, 3, 1)).astype(jnp.float32)

    # bf16 MXU weights in im2col-by-kh layout (K, K*Ci, Co); bias / BN params in f32.
    w1p = w1.reshape(K, K * Cin, Cmid).astype(jnp.bfloat16)
    w2p = w2.reshape(K, K * Cmid, Cout).astype(jnp.bfloat16)
    b1p = b1.reshape(1, Cmid).astype(jnp.float32)
    b2p = b2.reshape(1, Cout).astype(jnp.float32)
    g1p, bt1p = g1.reshape(1, Cmid).astype(jnp.float32), bt1.reshape(1, Cmid).astype(jnp.float32)
    g2p, bt2p = g2.reshape(1, Cout).astype(jnp.float32), bt2.reshape(1, Cout).astype(jnp.float32)

    def pick(cs, cd):
        if tile_h is not None and H % tile_h == 0:
            return tile_h
        return _pick_tile_h(N, H, W, cs, cd, budget)

    count = float(N * H * W)
    ones_cin = jnp.ones((1, Cin), jnp.float32)
    zeros_cin = jnp.zeros((1, Cin), jnp.float32)

    # --- pass 1: conv1 (+bias) with fused per-strip BN1 statistics ---
    th1 = pick(Cin, Cmid)
    y1, s1, q1 = _conv_stage(x_nhwc, ones_cin, zeros_cin, w1p, b1p, False, th1, vmem_limit)
    scale1, shift1 = _bn_affine(s1, q1, count, g1p, bt1p)

    # --- pass 2: BN1-apply + LeakyReLU fused into conv2's staging, conv2 + BN2 stats ---
    th2 = pick(Cmid, Cout)
    y2, s2, q2 = _conv_stage(y1, scale1, shift1, w2p, b2p, True, th2, vmem_limit)
    scale2, shift2 = _bn_affine(s2, q2, count, g2p, bt2p)

    # --- pass 3: BN2-apply + LeakyReLU (tiled, streamed) ---
    n_tiles3 = H // th2
    vmem = pl.BlockSpec(memory_space=pltpu.MemorySpace.VMEM)
    out_nhwc = pl.pallas_call(
        _bn_act_kernel,
        grid=(n_tiles3,),
        in_specs=[pl.BlockSpec((N, th2, W, Cout), lambda i: (0, i, 0, 0)), vmem, vmem],
        out_specs=pl.BlockSpec((N, th2, W, Cout), lambda i: (0, i, 0, 0)),
        out_shape=jax.ShapeDtypeStruct((N, H, W, Cout), jnp.float32),
        compiler_params=pltpu.CompilerParams(
            dimension_semantics=("parallel",), vmem_limit_bytes=vmem_limit),
    )(y2, scale2, shift2)

    return jnp.transpose(out_nhwc, (0, 3, 1, 2))                     # NHWC -> NCHW


def double_conv_ref(x_nchw, params):
    """Pure-JAX f32 reference matching PyTorch DoubleConv.forward (train-mode BN)."""
    w1, b1, g1, bt1, w2, b2, g2, bt2 = params
    x = jnp.transpose(x_nchw, (0, 2, 3, 1))

    def conv(x, w, b):
        y = lax.conv_general_dilated(
            x, w, window_strides=(1, 1), padding="SAME",
            dimension_numbers=("NHWC", "HWIO", "NHWC"))
        return y + b

    def bn_lrelu(y, g, bt):
        m = jnp.mean(y, axis=(0, 1, 2), keepdims=True)
        v = jnp.mean((y - m) ** 2, axis=(0, 1, 2), keepdims=True)
        yn = (y - m) * lax.rsqrt(v + BN_EPS) * g + bt
        return jnp.where(yn >= 0, yn, LRELU_SLOPE * yn)

    h = bn_lrelu(conv(x, w1, b1), g1, bt1)
    h = bn_lrelu(conv(h, w2, b2), g2, bt2)
    return jnp.transpose(h, (0, 3, 1, 2))


def init_params(key, in_c, out_c, mid_c=None):
    if mid_c is None:
        mid_c = out_c
    ks = jax.random.split(key, 8)
    # conv weights stored directly in HWIO layout (3,3,in,out); biases / BN params as (1,C)
    w1 = 0.2 * jax.random.normal(ks[0], (K, K, in_c, mid_c), jnp.float32)
    b1 = 0.1 * jax.random.normal(ks[1], (1, mid_c), jnp.float32)
    g1 = 1.0 + 0.1 * jax.random.normal(ks[2], (1, mid_c), jnp.float32)
    bt1 = 0.1 * jax.random.normal(ks[3], (1, mid_c), jnp.float32)
    w2 = 0.2 * jax.random.normal(ks[4], (K, K, mid_c, out_c), jnp.float32)
    b2 = 0.1 * jax.random.normal(ks[5], (1, out_c), jnp.float32)
    g2 = 1.0 + 0.1 * jax.random.normal(ks[6], (1, out_c), jnp.float32)
    bt2 = 0.1 * jax.random.normal(ks[7], (1, out_c), jnp.float32)
    return (w1, b1, g1, bt1, w2, b2, g2, bt2)


if __name__ == "__main__":
    key = jax.random.PRNGKey(0)
    kx, kp = jax.random.split(key)

    N, in_c, out_c, H, W = 2, 4, 8, 16, 16
    x = jax.random.normal(kx, (N, in_c, H, W), jnp.float32)
    params = init_params(kp, in_c, out_c)

    out = double_conv_pallas(x, params)
    out = jax.block_until_ready(out)

    ref = jax.block_until_ready(double_conv_ref(x, params))
    assert out.shape == (N, out_c, H, W), out.shape
    # Tolerance sized for bf16 MXU operands + bf16 HBM intermediates vs the f32 reference.
    assert jnp.allclose(out, ref, rtol=5e-2, atol=5e-2), (
        float(jnp.max(jnp.abs(out - ref))))

    print("KERNEL_OK")
</pallas_src>

<mosaic_0001>
module attributes {stable_mosaic.version = 11 : i64} {
  func.func @_conv_bn_stats_kernel(%arg0: i32, %arg1: memref<2x1x16x4xf32, #tpu.memory_space<vmem>>, %arg2: memref<2x8x16x4xf32, #tpu.memory_space<vmem>>, %arg3: memref<2x1x16x4xf32, #tpu.memory_space<vmem>>, %arg4: memref<1x4xf32, #tpu.memory_space<vmem>>, %arg5: memref<1x4xf32, #tpu.memory_space<vmem>>, %arg6: memref<3x12x8xbf16, #tpu.memory_space<vmem>>, %arg7: memref<1x8xf32, #tpu.memory_space<vmem>>, %arg8: memref<2x8x16x8xbf16, #tpu.memory_space<vmem>>, %arg9: memref<1x1x8xf32, #tpu.memory_space<vmem>>, %arg10: memref<1x1x8xf32, #tpu.memory_space<vmem>>) attributes {dimension_semantics = [#tpu.dimension_semantics<parallel>], iteration_bounds = array<i64: 2>, scalar_prefetch = 0 : i64, scratch_operands = 0 : i64, tpu.core_type = #tpu.core_type<tc>, window_params = [{transform_indices = @transform_0, window_bounds = array<i64: 2, 1, 16, 4>}, {transform_indices = @transform_1, window_bounds = array<i64: 2, 8, 16, 4>}, {transform_indices = @transform_2, window_bounds = array<i64: 2, 1, 16, 4>}, {pipeline_mode = #tpu.pipeline_mode<synchronous>, transform_indices = @transform_3, window_bounds = array<i64: 1, 4>}, {pipeline_mode = #tpu.pipeline_mode<synchronous>, transform_indices = @transform_4, window_bounds = array<i64: 1, 4>}, {pipeline_mode = #tpu.pipeline_mode<synchronous>, transform_indices = @transform_5, window_bounds = array<i64: 3, 12, 8>}, {pipeline_mode = #tpu.pipeline_mode<synchronous>, transform_indices = @transform_6, window_bounds = array<i64: 1, 8>}, {transform_indices = @transform_7, window_bounds = array<i64: 2, 8, 16, 8>}, {transform_indices = @transform_8, window_bounds = array<i64: 1, 1, 8>}, {transform_indices = @transform_9, window_bounds = array<i64: 1, 1, 8>}]} {
    %c0 = arith.constant 0 : index
    %c0_0 = arith.constant 0 : index
    %c0_1 = arith.constant 0 : index
    %c0_2 = arith.constant 0 : index
    %0 = vector.load %arg2[%c0, %c0_0, %c0_1, %c0_2] : memref<2x8x16x4xf32, #tpu.memory_space<vmem>>, vector<2x8x16x4xf32>
    %1 = arith.truncf %0 : vector<2x8x16x4xf32> to vector<2x8x16x4xbf16>
    %c0_i32 = arith.constant 0 : i32
    %2 = arith.cmpi sgt, %arg0, %c0_i32 : i32
    %c0_3 = arith.constant 0 : index
    %c0_4 = arith.constant 0 : index
    %c0_5 = arith.constant 0 : index
    %c0_6 = arith.constant 0 : index
    %3 = vector.load %arg1[%c0_3, %c0_4, %c0_5, %c0_6] : memref<2x1x16x4xf32, #tpu.memory_space<vmem>>, vector<2x1x16x4xf32>
    %cst = arith.constant 0.000000e+00 : f32
    %4 = vector.broadcast %cst : f32 to vector<2x1x16x4xf32>
    %5 = arith.select %2, %3, %4 : vector<2x1x16x4xf32>
    %6 = arith.truncf %5 : vector<2x1x16x4xf32> to vector<2x1x16x4xbf16>
    %c1_i32 = arith.constant 1 : i32
    %7 = arith.cmpi slt, %arg0, %c1_i32 : i32
    %c0_7 = arith.constant 0 : index
    %c0_8 = arith.constant 0 : index
    %c0_9 = arith.constant 0 : index
    %c0_10 = arith.constant 0 : index
    %8 = vector.load %arg3[%c0_7, %c0_8, %c0_9, %c0_10] : memref<2x1x16x4xf32, #tpu.memory_space<vmem>>, vector<2x1x16x4xf32>
    %cst_11 = arith.constant 0.000000e+00 : f32
    %9 = vector.broadcast %cst_11 : f32 to vector<2x1x16x4xf32>
    %10 = arith.select %7, %8, %9 : vector<2x1x16x4xf32>
    %11 = arith.truncf %10 : vector<2x1x16x4xf32> to vector<2x1x16x4xbf16>
    %12 = tpu.concatenate %6, %1, %11 in 1 : vector<2x1x16x4xbf16>, vector<2x8x16x4xbf16>, vector<2x1x16x4xbf16> -> vector<2x10x16x4xbf16>
    %cst_12 = arith.constant 0.000000e+00 : bf16
    %13 = vector.broadcast %cst_12 : bf16 to vector<2x10x1x4xbf16>
    %14 = tpu.concatenate %13, %12, %13 in 2 : vector<2x10x1x4xbf16>, vector<2x10x16x4xbf16>, vector<2x10x1x4xbf16> -> vector<2x10x18x4xbf16>
    %cst_13 = arith.constant 0.000000e+00 : f32
    %15 = vector.broadcast %cst_13 : f32 to vector<256x8xf32>
    %16 = vector.extract_strided_slice %14 {offsets = [0, 0, 0, 0], sizes = [2, 8, 16, 4], strides = [1, 1, 1, 1]} : vector<2x10x18x4xbf16> to vector<2x8x16x4xbf16>
    %17 = vector.extract_strided_slice %14 {offsets = [0, 0, 1, 0], sizes = [2, 8, 16, 4], strides = [1, 1, 1, 1]} : vector<2x10x18x4xbf16> to vector<2x8x16x4xbf16>
    %18 = vector.extract_strided_slice %14 {offsets = [0, 0, 2, 0], sizes = [2, 8, 16, 4], strides = [1, 1, 1, 1]} : vector<2x10x18x4xbf16> to vector<2x8x16x4xbf16>
    %19 = tpu.concatenate %16, %17, %18 in 3 : vector<2x8x16x4xbf16>, vector<2x8x16x4xbf16>, vector<2x8x16x4xbf16> -> vector<2x8x16x12xbf16>
    %20 = vector.shape_cast %19 : vector<2x8x16x12xbf16> to vector<256x12xbf16>
    %c0_14 = arith.constant 0 : index
    %c0_15 = arith.constant 0 : index
    %c0_16 = arith.constant 0 : index
    %21 = vector.load %arg6[%c0_14, %c0_15, %c0_16] : memref<3x12x8xbf16, #tpu.memory_space<vmem>>, vector<1x12x8xbf16>
    %22 = vector.shape_cast %21 : vector<1x12x8xbf16> to vector<12x8xbf16>
    %cst_17 = arith.constant dense<0.000000e+00> : vector<256x8xf32>
    %23 = tpu.matmul %20, %22, %cst_17 {dimension_numbers = #tpu.dot_dimension_numbers<[1], [0], [0], [1], [0, 0, 1, 1], [], []>} : vector<256x12xbf16>, vector<12x8xbf16>, vector<256x8xf32> -> vector<256x8xf32>
    %24 = arith.addf %15, %23 : vector<256x8xf32>
    %25 = vector.extract_strided_slice %14 {offsets = [0, 1, 0, 0], sizes = [2, 8, 16, 4], strides = [1, 1, 1, 1]} : vector<2x10x18x4xbf16> to vector<2x8x16x4xbf16>
    %26 = vector.extract_strided_slice %14 {offsets = [0, 1, 1, 0], sizes = [2, 8, 16, 4], strides = [1, 1, 1, 1]} : vector<2x10x18x4xbf16> to vector<2x8x16x4xbf16>
    %27 = vector.extract_strided_slice %14 {offsets = [0, 1, 2, 0], sizes = [2, 8, 16, 4], strides = [1, 1, 1, 1]} : vector<2x10x18x4xbf16> to vector<2x8x16x4xbf16>
    %28 = tpu.concatenate %25, %26, %27 in 3 : vector<2x8x16x4xbf16>, vector<2x8x16x4xbf16>, vector<2x8x16x4xbf16> -> vector<2x8x16x12xbf16>
    %29 = vector.shape_cast %28 : vector<2x8x16x12xbf16> to vector<256x12xbf16>
    %c1 = arith.constant 1 : index
    %c0_18 = arith.constant 0 : index
    %c0_19 = arith.constant 0 : index
    %30 = vector.load %arg6[%c1, %c0_18, %c0_19] : memref<3x12x8xbf16, #tpu.memory_space<vmem>>, vector<1x12x8xbf16>
    %31 = vector.shape_cast %30 : vector<1x12x8xbf16> to vector<12x8xbf16>
    %cst_20 = arith.constant dense<0.000000e+00> : vector<256x8xf32>
    %32 = tpu.matmul %29, %31, %cst_20 {dimension_numbers = #tpu.dot_dimension_numbers<[1], [0], [0], [1], [0, 0, 1, 1], [], []>} : vector<256x12xbf16>, vector<12x8xbf16>, vector<256x8xf32> -> vector<256x8xf32>
    %33 = arith.addf %24, %32 : vector<256x8xf32>
    %34 = vector.extract_strided_slice %14 {offsets = [0, 2, 0, 0], sizes = [2, 8, 16, 4], strides = [1, 1, 1, 1]} : vector<2x10x18x4xbf16> to vector<2x8x16x4xbf16>
    %35 = vector.extract_strided_slice %14 {offsets = [0, 2, 1, 0], sizes = [2, 8, 16, 4], strides = [1, 1, 1, 1]} : vector<2x10x18x4xbf16> to vector<2x8x16x4xbf16>
    %36 = vector.extract_strided_slice %14 {offsets = [0, 2, 2, 0], sizes = [2, 8, 16, 4], strides = [1, 1, 1, 1]} : vector<2x10x18x4xbf16> to vector<2x8x16x4xbf16>
    %37 = tpu.concatenate %34, %35, %36 in 3 : vector<2x8x16x4xbf16>, vector<2x8x16x4xbf16>, vector<2x8x16x4xbf16> -> vector<2x8x16x12xbf16>
    %38 = vector.shape_cast %37 : vector<2x8x16x12xbf16> to vector<256x12xbf16>
    %c2 = arith.constant 2 : index
    %c0_21 = arith.constant 0 : index
    %c0_22 = arith.constant 0 : index
    %39 = vector.load %arg6[%c2, %c0_21, %c0_22] : memref<3x12x8xbf16, #tpu.memory_space<vmem>>, vector<1x12x8xbf16>
    %40 = vector.shape_cast %39 : vector<1x12x8xbf16> to vector<12x8xbf16>
    %cst_23 = arith.constant dense<0.000000e+00> : vector<256x8xf32>
    %41 = tpu.matmul %38, %40, %cst_23 {dimension_numbers = #tpu.dot_dimension_numbers<[1], [0], [0], [1], [0, 0, 1, 1], [], []>} : vector<256x12xbf16>, vector<12x8xbf16>, vector<256x8xf32> -> vector<256x8xf32>
    %42 = arith.addf %33, %41 : vector<256x8xf32>
    %c0_24 = arith.constant 0 : index
    %c0_25 = arith.constant 0 : index
    %43 = vector.load %arg7[%c0_24, %c0_25] : memref<1x8xf32, #tpu.memory_space<vmem>>, vector<1x8xf32>
    %44 = vector.broadcast %43 : vector<1x8xf32> to vector<256x8xf32>
    %45 = arith.addf %42, %44 : vector<256x8xf32>
    %46 = vector.shape_cast %45 : vector<256x8xf32> to vector<2x8x16x8xf32>
    %47 = arith.truncf %46 : vector<2x8x16x8xf32> to vector<2x8x16x8xbf16>
    %c0_26 = arith.constant 0 : index
    %c0_27 = arith.constant 0 : index
    %c0_28 = arith.constant 0 : index
    %c0_29 = arith.constant 0 : index
    %48 = vector.load %arg8[%c0_26, %c0_27, %c0_28, %c0_29] : memref<2x8x16x8xbf16, #tpu.memory_space<vmem>>, vector<2x8x16x8xbf16>
    tpu.vector_store %arg8[%c0_26, %c0_27, %c0_28, %c0_29], %47 {strides = array<i32>} : memref<2x8x16x8xbf16, #tpu.memory_space<vmem>>, vector<2x8x16x8xbf16>,
    %cst_30 = arith.constant dense<0.000000e+00> : vector<8xf32>
    %49 = vector.multi_reduction <add>, %45, %cst_30 [0] : vector<256x8xf32> to vector<8xf32>
    %50 = vector.shape_cast %49 : vector<8xf32> to vector<1x1x8xf32>
    %c0_31 = arith.constant 0 : index
    %c0_32 = arith.constant 0 : index
    %c0_33 = arith.constant 0 : index
    %51 = vector.load %arg9[%c0_31, %c0_32, %c0_33] : memref<1x1x8xf32, #tpu.memory_space<vmem>>, vector<1x1x8xf32>
    tpu.vector_store %arg9[%c0_31, %c0_32, %c0_33], %50 {strides = array<i32>} : memref<1x1x8xf32, #tpu.memory_space<vmem>>, vector<1x1x8xf32>,
    %52 = arith.mulf %45, %45 : vector<256x8xf32>
    %cst_34 = arith.constant dense<0.000000e+00> : vector<8xf32>
    %53 = vector.multi_reduction <add>, %52, %cst_34 [0] : vector<256x8xf32> to vector<8xf32>
    %54 = vector.shape_cast %53 : vector<8xf32> to vector<1x1x8xf32>
    %c0_35 = arith.constant 0 : index
    %c0_36 = arith.constant 0 : index
    %c0_37 = arith.constant 0 : index
    %55 = vector.load %arg10[%c0_35, %c0_36, %c0_37] : memref<1x1x8xf32, #tpu.memory_space<vmem>>, vector<1x1x8xf32>
    tpu.vector_store %arg10[%c0_35, %c0_36, %c0_37], %54 {strides = array<i32>} : memref<1x1x8xf32, #tpu.memory_space<vmem>>, vector<1x1x8xf32>,
    return
  }
  func.func @transform_0(%arg0: i32) -> (i32, i32, i32, i32) {
    %c8_i32 = arith.constant 8 : i32
    %0 = arith.muli %arg0, %c8_i32 : i32
    %c1_i32 = arith.constant 1 : i32
    %1 = arith.subi %0, %c1_i32 : i32
    %c0_i32 = arith.constant 0 : i32
    %2 = arith.maxsi %1, %c0_i32 : i32
    %c0_i32_0 = arith.constant 0 : i32
    %c0_i32_1 = arith.constant 0 : i32
    %c0_i32_2 = arith.constant 0 : i32
    %c0_i32_3 = arith.constant 0 : i32
    return %c0_i32_0, %2, %c0_i32_1, %c0_i32_2 : i32, i32, i32, i32
  }
  func.func @transform_1(%arg0: i32) -> (i32, i32, i32, i32) {
    %c0_i32 = arith.constant 0 : i32
    %c0_i32_0 = arith.constant 0 : i32
    %c0_i32_1 = arith.constant 0 : i32
    %c0_i32_2 = arith.constant 0 : i32
    return %c0_i32, %arg0, %c0_i32_0, %c0_i32_1 : i32, i32, i32, i32
  }
  func.func @transform_2(%arg0: i32) -> (i32, i32, i32, i32) {
    %c8_i32 = arith.constant 8 : i32
    %0 = arith.muli %arg0, %c8_i32 : i32
    %c8_i32_0 = arith.constant 8 : i32
    %1 = arith.addi %0, %c8_i32_0 : i32
    %c15_i32 = arith.constant 15 : i32
    %2 = arith.minsi %1, %c15_i32 : i32
    %c0_i32 = arith.constant 0 : i32
    %c0_i32_1 = arith.constant 0 : i32
    %c0_i32_2 = arith.constant 0 : i32
    %c0_i32_3 = arith.constant 0 : i32
    return %c0_i32, %2, %c0_i32_1, %c0_i32_2 : i32, i32, i32, i32
  }
  func.func @transform_3(%arg0: i32) -> (i32, i32) {
    %c0_i32 = arith.constant 0 : i32
    %c0_i32_0 = arith.constant 0 : i32
    %c0_i32_1 = arith.constant 0 : i32
    return %c0_i32, %c0_i32_0 : i32, i32
  }
  func.func @transform_4(%arg0: i32) -> (i32, i32) {
    %c0_i32 = arith.constant 0 : i32
    %c0_i32_0 = arith.constant 0 : i32
    %c0_i32_1 = arith.constant 0 : i32
    return %c0_i32, %c0_i32_0 : i32, i32
  }
  func.func @transform_5(%arg0: i32) -> (i32, i32, i32) {
    %c0_i32 = arith.constant 0 : i32
    %c0_i32_0 = arith.constant 0 : i32
    %c0_i32_1 = arith.constant 0 : i32
    %c0_i32_2 = arith.constant 0 : i32
    return %c0_i32, %c0_i32_0, %c0_i32_1 : i32, i32, i32
  }
  func.func @transform_6(%arg0: i32) -> (i32, i32) {
    %c0_i32 = arith.constant 0 : i32
    %c0_i32_0 = arith.constant 0 : i32
    %c0_i32_1 = arith.constant 0 : i32
    return %c0_i32, %c0_i32_0 : i32, i32
  }
  func.func @transform_7(%arg0: i32) -> (i32, i32, i32, i32) {
    %c0_i32 = arith.constant 0 : i32
    %c0_i32_0 = arith.constant 0 : i32
    %c0_i32_1 = arith.constant 0 : i32
    %c0_i32_2 = arith.constant 0 : i32
    return %c0_i32, %arg0, %c0_i32_0, %c0_i32_1 : i32, i32, i32, i32
  }
  func.func @transform_8(%arg0: i32) -> (i32, i32, i32) {
    %c0_i32 = arith.constant 0 : i32
    %c0_i32_0 = arith.constant 0 : i32
    %c0_i32_1 = arith.constant 0 : i32
    return %arg0, %c0_i32, %c0_i32_0 : i32, i32, i32
  }
  func.func @transform_9(%arg0: i32) -> (i32, i32, i32) {
    %c0_i32 = arith.constant 0 : i32
    %c0_i32_0 = arith.constant 0 : i32
    %c0_i32_1 = arith.constant 0 : i32
    return %arg0, %c0_i32, %c0_i32_0 : i32, i32, i32
  }
}

</mosaic_0001>

<llo_original>
// kernel: tpu_custom_call.1
$region0: #{tpu_custom_call.1}
  #allocation0 [shape = 'u32[]', space=smem, size = 0x4, offset = 0x4, fixed_abs, tag = 'smem constant byte address 0x4 - core index']
  #allocation1 [shape = 'u32[144,128]{1,0:T(1,128)}', space=vmem, size = 0x12000, scoped, tag = 'internal scratch']
  %s0 = inlined_call_operand.vmem [shape: f32[2,16,16,4], index: 0, kind: input, shape index: {}]
  %s1 = inlined_call_operand.vmem [shape: f32[2,16,16,4], index: 1, kind: input, shape index: {}]
  %s2 = inlined_call_operand.vmem [shape: f32[2,16,16,4], index: 2, kind: input, shape index: {}]
  %s3 = inlined_call_operand.vmem [shape: f32[1,4], index: 3, kind: input, shape index: {}]
  %s4 = inlined_call_operand.vmem [shape: f32[1,4], index: 4, kind: input, shape index: {}]
  %s5 = inlined_call_operand.vmem [shape: bf16[3,12,8], index: 5, kind: input, shape index: {}]
  %s6 = inlined_call_operand.vmem [shape: f32[1,8], index: 6, kind: input, shape index: {}]
  %s7 = inlined_call_operand.vmem [shape: bf16[2,16,16,8], index: 7, kind: output, shape index: {0}]
  %s8 = inlined_call_operand.hbm [shape: f32[2,1,8], index: 8, kind: output, shape index: {1}]
  %s9 = inlined_call_operand.hbm [shape: f32[2,1,8], index: 9, kind: output, shape index: {2}]
  %10 = xla_tuple %s7, %s8, %s9
  %s11 = sld [smem:[#allocation0]]
  $region228: #{tpu_custom_call.1} parent=0
    _
  %s13 = ssub.s32 1, %s11
  %s14 = scalar_select 0, %s13, %s11
  $region1: #{tpu_custom_call.1} parent=0
    #allocation2 [shape = 'u8[32768]{0}', space=vmem, size = 0x8000, scoped, tag = 'input window, operand 0']
    #allocation3 [shape = 'u8[262144]{0}', space=vmem, size = 0x40000, scoped, tag = 'input window, operand 1']
    #allocation4 [shape = 'u8[32768]{0}', space=vmem, size = 0x8000, scoped, tag = 'input window, operand 2']
    #allocation5 [shape = 'u8[131072]{0}', space=vmem, size = 0x20000, scoped, tag = 'output window, operand 0']
    #allocation6 [shape = 'u8[1024]{0}', space=vmem, size = 0x400, scoped, tag = 'output window, operand 1']
    #allocation7 [shape = 's32[2]{0}', space=sflag, size = 0x8, scoped, tag = 'scoped memory for tpu_custom_call.1']
    #allocation8 [shape = 'u8[1024]{0}', space=vmem, size = 0x400, scoped, tag = 'output window, operand 2']
    #allocation9 [shape = 's32[2]{0}', space=sflag, size = 0x8, scoped, tag = 'scoped memory for tpu_custom_call.1']
    %15 = vsyncpa [#allocation7], 0
    %s16 = scalar_lea.sflag [#allocation7], 1
    %17 = vsyncpa %s16, 0
    %18 = vsyncpa [#allocation9], 0
    %s19 = scalar_lea.sflag [#allocation9], 1
    %20 = vsyncpa %s19, 0
    loop: start=0, step=1, limit=4
    $region2: #{tpu_custom_call.1} parent=1 // loop_pre_header
      _
    $region3: #{tpu_custom_call.1} parent=1 // loop_header
      %s22 = sphi 0, %s26
      %p23 = scmp.ge.s32.totalorder %s22, 4
      %s40 = sphi 0, %s42
      %s43 = sphi 0, %s40
      %s44 = sphi 0, %s43
      %s60 = sphi 0, %s44
      %s66 = sphi 0, %s68
      %s69 = sphi 0, %s66
      %s70 = sphi 0, %s69
      %s86 = sphi 0, %s70
      %s100 = sphi 0, %s102
      %s103 = sphi 0, %s100
      %s104 = sphi 0, %s103
      %s120 = sphi 0, %s104
      %s124 = sphi 0, %s124
      %s126 = sphi 0, %s124
      %s127 = sphi 0, %s126
      %s141 = sphi 0, %s127
      %s145 = sphi 0, %s145
      %s147 = sphi 0, %s145
      %s148 = sphi 0, %s147
      %s162 = sphi 0, %s148
      %s166 = sphi 0, %s166
      %s168 = sphi 0, %s166
      %s169 = sphi 0, %s168
      %s183 = sphi 0, %s169
      %s187 = sphi 0, %s187
      %s189 = sphi 0, %s187
      %s190 = sphi 0, %s189
      %s204 = sphi 0, %s190
      %s210 = sphi 0, %s212
      %s213 = sphi 0, %s210
      %s214 = sphi 0, %s213
      %s230 = sphi 0, %s214
      %s236 = sphi 0, %s238
      %s239 = sphi 0, %s236
      %s240 = sphi 0, %s239
      %s256 = sphi 0, %s240
      %s262 = sphi 0, %s264
      %s265 = sphi 0, %s262
      %s266 = sphi 0, %s265
      %s282 = sphi 0, %s266
    $region4: #{tpu_custom_call.1} parent=1 // loop_header_branch
      %25 = sbr.rel (%p23) target = $region8
    $region5: #{tpu_custom_call.1} parent=1 // loop_body
      %s27 = ssub.s32 %s22, 1
      %s28 = ssub.s32 %s22, 2
      %s29 = sadd.s32 %s22, 1
      %s30 = smul.u32 %s22, 8
      %s31 = ssub.s32 %s30, 1
      %p32 = scmp.gt.s32.totalorder %s31, 0
      %s33 = scalar_select %p32, %s31, 0
      %s34 = smul.u32 %s29, 8
      %s35 = ssub.s32 %s34, 1
      %p36 = scmp.gt.s32.totalorder %s35, 0
      %s37 = scalar_select %p36, %s35, 0
      %s38 = ssub.s32 %s33, %s37
      %p39 = scmp.eq.s32.totalorder %s38, 0
      %s41 = sadd.s32 %s40, 1
      %s42 = scalar_select %p39, %s40, %s41
      %p45 = pneg %p39
      %p46 = scmp.eq.s32.totalorder %s22, 1
      %p47 = por %p45, %p46
      %p48 = scmp.ne.s32.totalorder %s40, %s43
      %p49 = scmp.eq.s32.totalorder %s22, 0
      %p50 = por %p48, %p49
      %p51 = scmp.ne.s32.totalorder %s40, %s43
      %p52 = scmp.eq.s32.totalorder %s27, 1
      %p53 = por %p51, %p52
      %p54 = scmp.ne.s32.totalorder %s43, %s44
      %p55 = scmp.eq.s32.totalorder %s27, 0
      %p56 = por %p54, %p55
      %p57 = scmp.ne.s32.totalorder %s43, %s44
      %p58 = scmp.eq.s32.totalorder %s28, 1
      %p59 = por %p57, %p58
      %p61 = scmp.ne.s32.totalorder %s44, %s60
      %p62 = scmp.eq.s32.totalorder %s28, 0
      %p63 = por %p61, %p62
      %s64 = ssub.s32 %s22, %s29
      %p65 = scmp.eq.s32.totalorder %s64, 0
      %s67 = sadd.s32 %s66, 1
      %s68 = scalar_select %p65, %s66, %s67
      %p71 = pneg %p65
      %p72 = scmp.eq.s32.totalorder %s22, 1
      %p73 = por %p71, %p72
      %p74 = scmp.ne.s32.totalorder %s66, %s69
      %p75 = scmp.eq.s32.totalorder %s22, 0
      %p76 = por %p74, %p75
      %p77 = scmp.ne.s32.totalorder %s66, %s69
      %p78 = scmp.eq.s32.totalorder %s27, 1
      %p79 = por %p77, %p78
      %p80 = scmp.ne.s32.totalorder %s69, %s70
      %p81 = scmp.eq.s32.totalorder %s27, 0
      %p82 = por %p80, %p81
      %p83 = scmp.ne.s32.totalorder %s69, %s70
      %p84 = scmp.eq.s32.totalorder %s28, 1
      %p85 = por %p83, %p84
      %p87 = scmp.ne.s32.totalorder %s70, %s86
      %p88 = scmp.eq.s32.totalorder %s28, 0
      %p89 = por %p87, %p88
      %s90 = smul.u32 %s22, 8
      %s91 = sadd.s32 %s90, 8
      %p92 = scmp.lt.s32.totalorder %s91, 15
      %s93 = scalar_select %p92, %s91, 15
      %s94 = smul.u32 %s29, 8
      %s95 = sadd.s32 %s94, 8
      %p96 = scmp.lt.s32.totalorder %s95, 15
      %s97 = scalar_select %p96, %s95, 15
      %s98 = ssub.s32 %s93, %s97
      %p99 = scmp.eq.s32.totalorder %s98, 0
      %s101 = sadd.s32 %s100, 1
      %s102 = scalar_select %p99, %s100, %s101
      %p105 = pneg %p99
      %p106 = scmp.eq.s32.totalorder %s22, 1
      %p107 = por %p105, %p106
      %p108 = scmp.ne.s32.totalorder %s100, %s103
      %p109 = scmp.eq.s32.totalorder %s22, 0
      %p110 = por %p108, %p109
      %p111 = scmp.ne.s32.totalorder %s100, %s103
      %p112 = scmp.eq.s32.totalorder %s27, 1
      %p113 = por %p111, %p112
      %p114 = scmp.ne.s32.totalorder %s103, %s104
      %p115 = scmp.eq.s32.totalorder %s27, 0
      %p116 = por %p114, %p115
      %p117 = scmp.ne.s32.totalorder %s103, %s104
      %p118 = scmp.eq.s32.totalorder %s28, 1
      %p119 = por %p117, %p118
      %p121 = scmp.ne.s32.totalorder %s104, %s120
      %p122 = scmp.eq.s32.totalorder %s28, 0
      %p123 = por %p121, %p122
      %s125 = sadd.s32 %s124, 1
      %p128 = scmp.eq.s32.totalorder %s22, 1
      %p129 = scmp.ne.s32.totalorder %s124, %s126
      %p130 = scmp.eq.s32.totalorder %s22, 0
      %p131 = por %p129, %p130
      %p132 = scmp.ne.s32.totalorder %s124, %s126
      %p133 = scmp.eq.s32.totalorder %s27, 1
      %p134 = por %p132, %p133
      %p135 = scmp.ne.s32.totalorder %s126, %s127
      %p136 = scmp.eq.s32.totalorder %s27, 0
      %p137 = por %p135, %p136
      %p138 = scmp.ne.s32.totalorder %s126, %s127
      %p139 = scmp.eq.s32.totalorder %s28, 1
      %p140 = por %p138, %p139
      %p142 = scmp.ne.s32.totalorder %s127, %s141
      %p143 = scmp.eq.s32.totalorder %s28, 0
      %p144 = por %p142, %p143
      %s146 = sadd.s32 %s145, 1
      %p149 = scmp.eq.s32.totalorder %s22, 1
      %p150 = scmp.ne.s32.totalorder %s145, %s147
      %p151 = scmp.eq.s32.totalorder %s22, 0
      %p152 = por %p150, %p151
      %p153 = scmp.ne.s32.totalorder %s145, %s147
      %p154 = scmp.eq.s32.totalorder %s27, 1
      %p155 = por %p153, %p154
      %p156 = scmp.ne.s32.totalorder %s147, %s148
      %p157 = scmp.eq.s32.totalorder %s27, 0
      %p158 = por %p156, %p157
      %p159 = scmp.ne.s32.totalorder %s147, %s148
      %p160 = scmp.eq.s32.totalorder %s28, 1
      %p161 = por %p159, %p160
      %p163 = scmp.ne.s32.totalorder %s148, %s162
      %p164 = scmp.eq.s32.totalorder %s28, 0
      %p165 = por %p163, %p164
      %s167 = sadd.s32 %s166, 1
      %p170 = scmp.eq.s32.totalorder %s22, 1
      %p171 = scmp.ne.s32.totalorder %s166, %s168
      %p172 = scmp.eq.s32.totalorder %s22, 0
      %p173 = por %p171, %p172
      %p174 = scmp.ne.s32.totalorder %s166, %s168
      %p175 = scmp.eq.s32.totalorder %s27, 1
      %p176 = por %p174, %p175
      %p177 = scmp.ne.s32.totalorder %s168, %s169
      %p178 = scmp.eq.s32.totalorder %s27, 0
      %p179 = por %p177, %p178
      %p180 = scmp.ne.s32.totalorder %s168, %s169
      %p181 = scmp.eq.s32.totalorder %s28, 1
      %p182 = por %p180, %p181
      %p184 = scmp.ne.s32.totalorder %s169, %s183
      %p185 = scmp.eq.s32.totalorder %s28, 0
      %p186 = por %p184, %p185
      %s188 = sadd.s32 %s187, 1
      %p191 = scmp.eq.s32.totalorder %s22, 1
      %p192 = scmp.ne.s32.totalorder %s187, %s189
      %p193 = scmp.eq.s32.totalorder %s22, 0
      %p194 = por %p192, %p193
      %p195 = scmp.ne.s32.totalorder %s187, %s189
      %p196 = scmp.eq.s32.totalorder %s27, 1
      %p197 = por %p195, %p196
      %p198 = scmp.ne.s32.totalorder %s189, %s190
      %p199 = scmp.eq.s32.totalorder %s27, 0
      %p200 = por %p198, %p199
      %p201 = scmp.ne.s32.totalorder %s189, %s190
      %p202 = scmp.eq.s32.totalorder %s28, 1
      %p203 = por %p201, %p202
      %p205 = scmp.ne.s32.totalorder %s190, %s204
      %p206 = scmp.eq.s32.totalorder %s28, 0
      %p207 = por %p205, %p206
      %s208 = ssub.s32 %s22, %s29
      %p209 = scmp.eq.s32.totalorder %s208, 0
      %s211 = sadd.s32 %s210, 1
      %s212 = scalar_select %p209, %s210, %s211
      %p215 = pneg %p209
      %p216 = scmp.eq.s32.totalorder %s22, 1
      %p217 = por %p215, %p216
      %p218 = scmp.ne.s32.totalorder %s210, %s213
      %p219 = scmp.eq.s32.totalorder %s22, 0
      %p220 = por %p218, %p219
      %p221 = scmp.ne.s32.totalorder %s210, %s213
      %p222 = scmp.eq.s32.totalorder %s27, 1
      %p223 = por %p221, %p222
      %p224 = scmp.ne.s32.totalorder %s213, %s214
      %p225 = scmp.eq.s32.totalorder %s27, 0
      %p226 = por %p224, %p225
      %p227 = scmp.ne.s32.totalorder %s213, %s214
      %p228 = scmp.eq.s32.totalorder %s28, 1
      %p229 = por %p227, %p228
      %p231 = scmp.ne.s32.totalorder %s214, %s230
      %p232 = scmp.eq.s32.totalorder %s28, 0
      %p233 = por %p231, %p232
      %s234 = ssub.s32 %s22, %s29
      %p235 = scmp.eq.s32.totalorder %s234, 0
      %s237 = sadd.s32 %s236, 1
      %s238 = scalar_select %p235, %s236, %s237
      %p241 = pneg %p235
      %p242 = scmp.eq.s32.totalorder %s22, 1
      %p243 = por %p241, %p242
      %p244 = scmp.ne.s32.totalorder %s236, %s239
      %p245 = scmp.eq.s32.totalorder %s22, 0
      %p246 = por %p244, %p245
      %p247 = scmp.ne.s32.totalorder %s236, %s239
      %p248 = scmp.eq.s32.totalorder %s27, 1
      %p249 = por %p247, %p248
      %p250 = scmp.ne.s32.totalorder %s239, %s240
      %p251 = scmp.eq.s32.totalorder %s27, 0
      %p252 = por %p250, %p251
      %p253 = scmp.ne.s32.totalorder %s239, %s240
      %p254 = scmp.eq.s32.totalorder %s28, 1
      %p255 = por %p253, %p254
      %p257 = scmp.ne.s32.totalorder %s240, %s256
      %p258 = scmp.eq.s32.totalorder %s28, 0
      %p259 = por %p257, %p258
      %s260 = ssub.s32 %s22, %s29
      %p261 = scmp.eq.s32.totalorder %s260, 0
      %s263 = sadd.s32 %s262, 1
      %s264 = scalar_select %p261, %s262, %s263
      %p267 = pneg %p261
      %p268 = scmp.eq.s32.totalorder %s22, 1
      %p269 = por %p267, %p268
      %p270 = scmp.ne.s32.totalorder %s262, %s265
      %p271 = scmp.eq.s32.totalorder %s22, 0
      %p272 = por %p270, %p271
      %p273 = scmp.ne.s32.totalorder %s262, %s265
      %p274 = scmp.eq.s32.totalorder %s27, 1
      %p275 = por %p273, %p274
      %p276 = scmp.ne.s32.totalorder %s265, %s266
      %p277 = scmp.eq.s32.totalorder %s27, 0
      %p278 = por %p276, %p277
      %p279 = scmp.ne.s32.totalorder %s265, %s266
      %p280 = scmp.eq.s32.totalorder %s28, 1
      %p281 = por %p279, %p280
      %p283 = scmp.ne.s32.totalorder %s266, %s282
      %p284 = scmp.eq.s32.totalorder %s28, 0
      %p285 = por %p283, %p284
      %p286 = scmp.le.s32.totalorder 1, %s22
      %p287 = scmp.lt.s32.totalorder %s22, 3
      %p288 = pnand %p286, %p287
      %p289 = pneg %p288
      // Predicated region
      $region9: #{tpu_custom_call.1} parent=5 // pred_check
        _
      $region10: #{tpu_custom_call.1} parent=5 // pred_check_branch
        %291 = sbr.rel (%p288) target = $region12
      $region11: #{tpu_custom_call.1} parent=5 // pred_region
        %s292 = ssub.s32 %s22, 1
        // Predicated region
        $region13: #{tpu_custom_call.1} parent=11 // pred_check
          %p293 = pneg %p137
        $region14: #{tpu_custom_call.1} parent=11 // pred_check_branch
          %295 = sbr.rel (%p293) target = $region16
        $region15: #{tpu_custom_call.1} parent=11 // pred_region
          _
        $region16: #{tpu_custom_call.1} parent=11 // pred_fallthru
          _
        // Predicated region
        $region17: #{tpu_custom_call.1} parent=11 // pred_check
          %p296 = pneg %p158
        $region18: #{tpu_custom_call.1} parent=11 // pred_check_branch
          %298 = sbr.rel (%p296) target = $region20
        $region19: #{tpu_custom_call.1} parent=11 // pred_region
          _
        $region20: #{tpu_custom_call.1} parent=11 // pred_fallthru
          _
        // Predicated region
        $region21: #{tpu_custom_call.1} parent=11 // pred_check
          %p299 = pneg %p179
        $region22: #{tpu_custom_call.1} parent=11 // pred_check_branch
          %301 = sbr.rel (%p299) target = $region24
        $region23: #{tpu_custom_call.1} parent=11 // pred_region
          _
        $region24: #{tpu_custom_call.1} parent=11 // pred_fallthru
          _
        // Predicated region
        $region25: #{tpu_custom_call.1} parent=11 // pred_check
          %p302 = pneg %p200
        $region26: #{tpu_custom_call.1} parent=11 // pred_check_branch
          %304 = sbr.rel (%p302) target = $region28
        $region27: #{tpu_custom_call.1} parent=11 // pred_region
          _
        $region28: #{tpu_custom_call.1} parent=11 // pred_fallthru
          _
      $region12: #{tpu_custom_call.1} parent=5 // pred_fallthru
        _
      %p305 = scmp.lt.s32.totalorder %s22, 2
      // Predicated region
      $region29: #{tpu_custom_call.1} parent=5 // pred_check
        %p306 = pneg %p305
      $region30: #{tpu_custom_call.1} parent=5 // pred_check_branch
        %308 = sbr.rel (%p306) target = $region32
      $region31: #{tpu_custom_call.1} parent=5 // pred_region
        // Predicated region
        $region33: #{tpu_custom_call.1} parent=31 // pred_check
          %p309 = pneg %p50
        $region34: #{tpu_custom_call.1} parent=31 // pred_check_branch
          %311 = sbr.rel (%p309) target = $region36
        $region35: #{tpu_custom_call.1} parent=31 // pred_region
          %s312 = sand.u32 %s40, 1
          %s313 = sand.u32 %s40, 1
          %s314 = smul.addr %s313, 32
          %s315 = scalar_lea.vmem [#allocation2], %s314
          %s316 = smul.u32 %s22, 8
          %s317 = ssub.s32 %s316, 1
          %p318 = scmp.gt.s32.totalorder %s317, 0
          %s319 = scalar_select %p318, %s317, 0
          %s320 = smul.addr %s319, 2
          %s321 = smul.addr %s320, 8
          %s322 = scalar_lea.vmem %s0, %s321
          // Predicated region
          $region37: #{tpu_custom_call.1} parent=35 // pred_check
            _
          $region38: #{tpu_custom_call.1} parent=35 // pred_check_branch
            %324 = sbr.rel (0) target = $region40
          $region39: #{tpu_custom_call.1} parent=35 // pred_region
            // Predicated region
            $region41: #{tpu_custom_call.1} parent=39 // pred_check
              _
            $region42: #{tpu_custom_call.1} parent=39 // pred_check_branch
              %326 = sbr.rel (0) target = $region44
            $region43: #{tpu_custom_call.1} parent=39 // pred_region
              // Predicated region
              $region56: #{tpu_custom_call.1} parent=43 // pred_check
                _
              $region57: #{tpu_custom_call.1} parent=43 // pred_check_branch
                %348 = sbr.rel (0) target = $region59
              $region58: #{tpu_custom_call.1} parent=43 // pred_region
                loop: start=0, step=1, limit=1
                $region60: #{tpu_custom_call.1} parent=58 // loop_pre_header
                  _
                $region61: #{tpu_custom_call.1} parent=58 // loop_header
                  %s350 = sphi 0, %s354
                  %p351 = scmp.ge.s32.totalorder %s350, 1
                  %s355 = sphi %s322, %s322
                  %s356 = sphi %s315, %s315
                $region62: #{tpu_custom_call.1} parent=58 // loop_header_branch
                  %353 = sbr.rel (%p351) target = $region66
                $region63: #{tpu_custom_call.1} parent=58 // loop_body
                  %v357 = vld [vmem:[%s355] sm:$0xff]
                  %358 = vst [vmem:[%s356] sm:$0xff] %v357
                  %v359 = vld [vmem:[%s355 + $0x8] sm:$0xff]
                  %360 = vst [vmem:[%s356 + $0x8] sm:$0xff] %v359
                  %v361 = vld [vmem:[%s355 + $0x100] sm:$0xff]
                  %362 = vst [vmem:[%s356 + $0x10] sm:$0xff] %v361
                  %v363 = vld [vmem:[%s355 + $0x108] sm:$0xff]
                  %364 = vst [vmem:[%s356 + $0x18] sm:$0xff] %v363
                $region64: #{tpu_custom_call.1} parent=58 // loop_footer
                  %s354 = sadd.s32 1, %s350
                $region65: #{tpu_custom_call.1} parent=58 // loop_footer_branch
                  %349 = sbr.rel target = $region61
                $region66: #{tpu_custom_call.1} parent=58 // loop_exit
                  _
              $region59: #{tpu_custom_call.1} parent=43 // pred_fallthru
                _
              // Predicated region
              $region67: #{tpu_custom_call.1} parent=43 // pred_check
                _
              $region68: #{tpu_custom_call.1} parent=43 // pred_check_branch
                %366 = sbr.rel target = $region70
              $region69: #{tpu_custom_call.1} parent=43 // pred_region
                _
              $region70: #{tpu_custom_call.1} parent=43 // pred_fallthru
                _
            $region44: #{tpu_custom_call.1} parent=39 // pred_fallthru
              _
            // Predicated region
            $region45: #{tpu_custom_call.1} parent=39 // pred_check
              _
            $region46: #{tpu_custom_call.1} parent=39 // pred_check_branch
              %328 = sbr.rel target = $region48
            $region47: #{tpu_custom_call.1} parent=39 // pred_region
              %s330 = ssub.s32 256, 1
              loop: start=0, step=1, limit=1
              $region49: #{tpu_custom_call.1} parent=47 // loop_pre_header
                _
              $region50: #{tpu_custom_call.1} parent=47 // loop_header
                %s332 = sphi 0, %s336
                %p333 = scmp.ge.s32.totalorder %s332, 1
                %s337 = sphi %s322, %s322
                %s338 = sphi %s315, %s315
              $region51: #{tpu_custom_call.1} parent=47 // loop_header_branch
                %335 = sbr.rel (%p333) target = $region55
              $region52: #{tpu_custom_call.1} parent=47 // loop_body
                %v339 = vld [vmem:[%s337] sm:%s330]
                %340 = vst [vmem:[%s338] sm:%s330] %v339
                %v341 = vld [vmem:[%s337 + $0x8] sm:%s330]
                %342 = vst [vmem:[%s338 + $0x8] sm:%s330] %v341
                %v343 = vld [vmem:[%s337 + $0x100] sm:%s330]
                %344 = vst [vmem:[%s338 + $0x10] sm:%s330] %v343
                %v345 = vld [vmem:[%s337 + $0x108] sm:%s330]
                %346 = vst [vmem:[%s338 + $0x18] sm:%s330] %v345
              $region53: #{tpu_custom_call.1} parent=47 // loop_footer
                %s336 = sadd.s32 1, %s332
              $region54: #{tpu_custom_call.1} parent=47 // loop_footer_branch
                %331 = sbr.rel target = $region50
              $region55: #{tpu_custom_call.1} parent=47 // loop_exit
                _
            $region48: #{tpu_custom_call.1} parent=39 // pred_fallthru
              _
          $region40: #{tpu_custom_call.1} parent=35 // pred_fallthru
            _
          %367 = vnop
        $region36: #{tpu_custom_call.1} parent=31 // pred_fallthru
          _
        // Predicated region
        $region71: #{tpu_custom_call.1} parent=31 // pred_check
          %p368 = pneg %p76
        $region72: #{tpu_custom_call.1} parent=31 // pred_check_branch
          %370 = sbr.rel (%p368) target = $region74
        $region73: #{tpu_custom_call.1} parent=31 // pred_region
          %s371 = sand.u32 %s66, 1
          %s372 = sand.u32 %s66, 1
          %s373 = smul.addr %s372, 256
          %s374 = scalar_lea.vmem [#allocation3], %s373
          %s375 = smul.u32 8, %s22
          %s376 = smul.addr %s375, 2
          %s377 = smul.addr %s376, 8
          %s378 = scalar_lea.vmem %s1, %s377
          // Predicated region
          $region75: #{tpu_custom_call.1} parent=73 // pred_check
            _
          $region76: #{tpu_custom_call.1} parent=73 // pred_check_branch
            %380 = sbr.rel (0) target = $region78
          $region77: #{tpu_custom_call.1} parent=73 // pred_region
            // Predicated region
            $region79: #{tpu_custom_call.1} parent=77 // pred_check
              _
            $region80: #{tpu_custom_call.1} parent=77 // pred_check_branch
              %382 = sbr.rel (0) target = $region82
            $region81: #{tpu_custom_call.1} parent=77 // pred_region
              // Predicated region
              $region94: #{tpu_custom_call.1} parent=81 // pred_check
                _
              $region95: #{tpu_custom_call.1} parent=81 // pred_check_branch
                %460 = sbr.rel (0) target = $region97
              $region96: #{tpu_custom_call.1} parent=81 // pred_region
                loop: start=0, step=1, limit=1
                $region98: #{tpu_custom_call.1} parent=96 // loop_pre_header
                  _
                $region99: #{tpu_custom_call.1} parent=96 // loop_header
                  %s462 = sphi 0, %s466
                  %p463 = scmp.ge.s32.totalorder %s462, 1
                  %s467 = sphi %s378, %s378
                  %s468 = sphi %s374, %s374
                $region100: #{tpu_custom_call.1} parent=96 // loop_header_branch
                  %465 = sbr.rel (%p463) target = $region104
                $region101: #{tpu_custom_call.1} parent=96 // loop_body
                  %v469 = vld [vmem:[%s467] sm:$0xff]
                  %470 = vst [vmem:[%s468] sm:$0xff] %v469
                  %v471 = vld [vmem:[%s467 + $0x8] sm:$0xff]
                  %472 = vst [vmem:[%s468 + $0x8] sm:$0xff] %v471
                  %v473 = vld [vmem:[%s467 + $0x10] sm:$0xff]
                  %474 = vst [vmem:[%s468 + $0x10] sm:$0xff] %v473
                  %v475 = vld [vmem:[%s467 + $0x18] sm:$0xff]
                  %476 = vst [vmem:[%s468 + $0x18] sm:$0xff] %v475
                  %v477 = vld [vmem:[%s467 + $0x20] sm:$0xff]
                  %478 = vst [vmem:[%s468 + $0x20] sm:$0xff] %v477
                  %v479 = vld [vmem:[%s467 + $0x28] sm:$0xff]
                  %480 = vst [vmem:[%s468 + $0x28] sm:$0xff] %v479
                  %v481 = vld [vmem:[%s467 + $0x30] sm:$0xff]
                  %482 = vst [vmem:[%s468 + $0x30] sm:$0xff] %v481
                  %v483 = vld [vmem:[%s467 + $0x38] sm:$0xff]
                  %484 = vst [vmem:[%s468 + $0x38] sm:$0xff] %v483
                  %v485 = vld [vmem:[%s467 + $0x40] sm:$0xff]
                  %486 = vst [vmem:[%s468 + $0x40] sm:$0xff] %v485
                  %v487 = vld [vmem:[%s467 + $0x48] sm:$0xff]
                  %488 = vst [vmem:[%s468 + $0x48] sm:$0xff] %v487
                  %v489 = vld [vmem:[%s467 + $0x50] sm:$0xff]
                  %490 = vst [vmem:[%s468 + $0x50] sm:$0xff] %v489
                  %v491 = vld [vmem:[%s467 + $0x58] sm:$0xff]
                  %492 = vst [vmem:[%s468 + $0x58] sm:$0xff] %v491
                  %v493 = vld [vmem:[%s467 + $0x60] sm:$0xff]
                  %494 = vst [vmem:[%s468 + $0x60] sm:$0xff] %v493
                  %v495 = vld [vmem:[%s467 + $0x68] sm:$0xff]
                  %496 = vst [vmem:[%s468 + $0x68] sm:$0xff] %v495
                  %v497 = vld [vmem:[%s467 + $0x70] sm:$0xff]
                  %498 = vst [vmem:[%s468 + $0x70] sm:$0xff] %v497
                  %v499 = vld [vmem:[%s467 + $0x78] sm:$0xff]
                  %500 = vst [vmem:[%s468 + $0x78] sm:$0xff] %v499
                  %v501 = vld [vmem:[%s467 + $0x100] sm:$0xff]
                  %502 = vst [vmem:[%s468 + $0x80] sm:$0xff] %v501
                  %v503 = vld [vmem:[%s467 + $0x108] sm:$0xff]
                  %504 = vst [vmem:[%s468 + $0x88] sm:$0xff] %v503
                  %v505 = vld [vmem:[%s467 + $0x110] sm:$0xff]
                  %506 = vst [vmem:[%s468 + $0x90] sm:$0xff] %v505
                  %v507 = vld [vmem:[%s467 + $0x118] sm:$0xff]
                  %508 = vst [vmem:[%s468 + $0x98] sm:$0xff] %v507
                  %v509 = vld [vmem:[%s467 + $0x120] sm:$0xff]
                  %510 = vst [vmem:[%s468 + $0xa0] sm:$0xff] %v509
                  %v511 = vld [vmem:[%s467 + $0x128] sm:$0xff]
                  %512 = vst [vmem:[%s468 + $0xa8] sm:$0xff] %v511
                  %v513 = vld [vmem:[%s467 + $0x130] sm:$0xff]
                  %514 = vst [vmem:[%s468 + $0xb0] sm:$0xff] %v513
                  %v515 = vld [vmem:[%s467 + $0x138] sm:$0xff]
                  %516 = vst [vmem:[%s468 + $0xb8] sm:$0xff] %v515
                  %v517 = vld [vmem:[%s467 + $0x140] sm:$0xff]
                  %518 = vst [vmem:[%s468 + $0xc0] sm:$0xff] %v517
                  %v519 = vld [vmem:[%s467 + $0x148] sm:$0xff]
                  %520 = vst [vmem:[%s468 + $0xc8] sm:$0xff] %v519
                  %v521 = vld [vmem:[%s467 + $0x150] sm:$0xff]
                  %522 = vst [vmem:[%s468 + $0xd0] sm:$0xff] %v521
                  %v523 = vld [vmem:[%s467 + $0x158] sm:$0xff]
                  %524 = vst [vmem:[%s468 + $0xd8] sm:$0xff] %v523
                  %v525 = vld [vmem:[%s467 + $0x160] sm:$0xff]
                  %526 = vst [vmem:[%s468 + $0xe0] sm:$0xff] %v525
                  %v527 = vld [vmem:[%s467 + $0x168] sm:$0xff]
                  %528 = vst [vmem:[%s468 + $0xe8] sm:$0xff] %v527
                  %v529 = vld [vmem:[%s467 + $0x170] sm:$0xff]
                  %530 = vst [vmem:[%s468 + $0xf0] sm:$0xff] %v529
                  %v531 = vld [vmem:[%s467 + $0x178] sm:$0xff]
                  %532 = vst [vmem:[%s468 + $0xf8] sm:$0xff] %v531
                $region102: #{tpu_custom_call.1} parent=96 // loop_footer
                  %s466 = sadd.s32 1, %s462
                $region103: #{tpu_custom_call.1} parent=96 // loop_footer_branch
                  %461 = sbr.rel target = $region99
                $region104: #{tpu_custom_call.1} parent=96 // loop_exit
                  _
              $region97: #{tpu_custom_call.1} parent=81 // pred_fallthru
                _
              // Predicated region
              $region105: #{tpu_custom_call.1} parent=81 // pred_check
                _
              $region106: #{tpu_custom_call.1} parent=81 // pred_check_branch
                %534 = sbr.rel target = $region108
              $region107: #{tpu_custom_call.1} parent=81 // pred_region
                _
              $region108: #{tpu_custom_call.1} parent=81 // pred_fallthru
                _
            $region82: #{tpu_custom_call.1} parent=77 // pred_fallthru
              _
            // Predicated region
            $region83: #{tpu_custom_call.1} parent=77 // pred_check
              _
            $region84: #{tpu_custom_call.1} parent=77 // pred_check_branch
              %384 = sbr.rel target = $region86
            $region85: #{tpu_custom_call.1} parent=77 // pred_region
              %s386 = ssub.s32 256, 1
              loop: start=0, step=1, limit=1
              $region87: #{tpu_custom_call.1} parent=85 // loop_pre_header
                _
              $region88: #{tpu_custom_call.1} parent=85 // loop_header
                %s388 = sphi 0, %s392
                %p389 = scmp.ge.s32.totalorder %s388, 1
                %s393 = sphi %s378, %s378
                %s394 = sphi %s374, %s374
              $region89: #{tpu_custom_call.1} parent=85 // loop_header_branch
                %391 = sbr.rel (%p389) target = $region93
              $region90: #{tpu_custom_call.1} parent=85 // loop_body
                %v395 = vld [vmem:[%s393] sm:%s386]
                %396 = vst [vmem:[%s394] sm:%s386] %v395
                %v397 = vld [vmem:[%s393 + $0x8] sm:%s386]
                %398 = vst [vmem:[%s394 + $0x8] sm:%s386] %v397
                %v399 = vld [vmem:[%s393 + $0x10] sm:%s386]
                %400 = vst [vmem:[%s394 + $0x10] sm:%s386] %v399
                %v401 = vld [vmem:[%s393 + $0x18] sm:%s386]
                %402 = vst [vmem:[%s394 + $0x18] sm:%s386] %v401
                %v403 = vld [vmem:[%s393 + $0x20] sm:%s386]
                %404 = vst [vmem:[%s394 + $0x20] sm:%s386] %v403
                %v405 = vld [vmem:[%s393 + $0x28] sm:%s386]
                %406 = vst [vmem:[%s394 + $0x28] sm:%s386] %v405
                %v407 = vld [vmem:[%s393 + $0x30] sm:%s386]
                %408 = vst [vmem:[%s394 + $0x30] sm:%s386] %v407
                %v409 = vld [vmem:[%s393 + $0x38] sm:%s386]
                %410 = vst [vmem:[%s394 + $0x38] sm:%s386] %v409
                %v411 = vld [vmem:[%s393 + $0x40] sm:%s386]
                %412 = vst [vmem:[%s394 + $0x40] sm:%s386] %v411
                %v413 = vld [vmem:[%s393 + $0x48] sm:%s386]
                %414 = vst [vmem:[%s394 + $0x48] sm:%s386] %v413
                %v415 = vld [vmem:[%s393 + $0x50] sm:%s386]
                %416 = vst [vmem:[%s394 + $0x50] sm:%s386] %v415
                %v417 = vld [vmem:[%s393 + $0x58] sm:%s386]
                %418 = vst [vmem:[%s394 + $0x58] sm:%s386] %v417
                %v419 = vld [vmem:[%s393 + $0x60] sm:%s386]
                %420 = vst [vmem:[%s394 + $0x60] sm:%s386] %v419
                %v421 = vld [vmem:[%s393 + $0x68] sm:%s386]
                %422 = vst [vmem:[%s394 + $0x68] sm:%s386] %v421
                %v423 = vld [vmem:[%s393 + $0x70] sm:%s386]
                %424 = vst [vmem:[%s394 + $0x70] sm:%s386] %v423
                %v425 = vld [vmem:[%s393 + $0x78] sm:%s386]
                %426 = vst [vmem:[%s394 + $0x78] sm:%s386] %v425
                %v427 = vld [vmem:[%s393 + $0x100] sm:%s386]
                %428 = vst [vmem:[%s394 + $0x80] sm:%s386] %v427
                %v429 = vld [vmem:[%s393 + $0x108] sm:%s386]
                %430 = vst [vmem:[%s394 + $0x88] sm:%s386] %v429
                %v431 = vld [vmem:[%s393 + $0x110] sm:%s386]
                %432 = vst [vmem:[%s394 + $0x90] sm:%s386] %v431
                %v433 = vld [vmem:[%s393 + $0x118] sm:%s386]
                %434 = vst [vmem:[%s394 + $0x98] sm:%s386] %v433
                %v435 = vld [vmem:[%s393 + $0x120] sm:%s386]
                %436 = vst [vmem:[%s394 + $0xa0] sm:%s386] %v435
                %v437 = vld [vmem:[%s393 + $0x128] sm:%s386]
                %438 = vst [vmem:[%s394 + $0xa8] sm:%s386] %v437
                %v439 = vld [vmem:[%s393 + $0x130] sm:%s386]
                %440 = vst [vmem:[%s394 + $0xb0] sm:%s386] %v439
                %v441 = vld [vmem:[%s393 + $0x138] sm:%s386]
                %442 = vst [vmem:[%s394 + $0xb8] sm:%s386] %v441
                %v443 = vld [vmem:[%s393 + $0x140] sm:%s386]
                %444 = vst [vmem:[%s394 + $0xc0] sm:%s386] %v443
                %v445 = vld [vmem:[%s393 + $0x148] sm:%s386]
                %446 = vst [vmem:[%s394 + $0xc8] sm:%s386] %v445
                %v447 = vld [vmem:[%s393 + $0x150] sm:%s386]
                %448 = vst [vmem:[%s394 + $0xd0] sm:%s386] %v447
                %v449 = vld [vmem:[%s393 + $0x158] sm:%s386]
                %450 = vst [vmem:[%s394 + $0xd8] sm:%s386] %v449
                %v451 = vld [vmem:[%s393 + $0x160] sm:%s386]
                %452 = vst [vmem:[%s394 + $0xe0] sm:%s386] %v451
                %v453 = vld [vmem:[%s393 + $0x168] sm:%s386]
                %454 = vst [vmem:[%s394 + $0xe8] sm:%s386] %v453
                %v455 = vld [vmem:[%s393 + $0x170] sm:%s386]
                %456 = vst [vmem:[%s394 + $0xf0] sm:%s386] %v455
                %v457 = vld [vmem:[%s393 + $0x178] sm:%s386]
                %458 = vst [vmem:[%s394 + $0xf8] sm:%s386] %v457
              $region91: #{tpu_custom_call.1} parent=85 // loop_footer
                %s392 = sadd.s32 1, %s388
              $region92: #{tpu_custom_call.1} parent=85 // loop_footer_branch
                %387 = sbr.rel target = $region88
              $region93: #{tpu_custom_call.1} parent=85 // loop_exit
                _
            $region86: #{tpu_custom_call.1} parent=77 // pred_fallthru
              _
          $region78: #{tpu_custom_call.1} parent=73 // pred_fallthru
            _
          %535 = vnop
        $region74: #{tpu_custom_call.1} parent=31 // pred_fallthru
          _
        // Predicated region
        $region109: #{tpu_custom_call.1} parent=31 // pred_check
          %p536 = pneg %p110
        $region110: #{tpu_custom_call.1} parent=31 // pred_check_branch
          %538 = sbr.rel (%p536) target = $region112
        $region111: #{tpu_custom_call.1} parent=31 // pred_region
          %s539 = sand.u32 %s100, 1
          %s540 = sand.u32 %s100, 1
          %s541 = smul.addr %s540, 32
          %s542 = scalar_lea.vmem [#allocation4], %s541
          %s543 = smul.u32 %s22, 8
          %s544 = sadd.s32 %s543, 8
          %p545 = scmp.lt.s32.totalorder %s544, 15
          %s546 = scalar_select %p545, %s544, 15
          %s547 = smul.addr %s546, 2
          %s548 = smul.addr %s547, 8
          %s549 = scalar_lea.vmem %s2, %s548
          // Predicated region
          $region113: #{tpu_custom_call.1} parent=111 // pred_check
            _
          $region114: #{tpu_custom_call.1} parent=111 // pred_check_branch
            %551 = sbr.rel (0) target = $region116
          $region115: #{tpu_custom_call.1} parent=111 // pred_region
            // Predicated region
            $region117: #{tpu_custom_call.1} parent=115 // pred_check
              _
            $region118: #{tpu_custom_call.1} parent=115 // pred_check_branch
              %553 = sbr.rel (0) target = $region120
            $region119: #{tpu_custom_call.1} parent=115 // pred_region
              // Predicated region
              $region132: #{tpu_custom_call.1} parent=119 // pred_check
                _
              $region133: #{tpu_custom_call.1} parent=119 // pred_check_branch
                %575 = sbr.rel (0) target = $region135
              $region134: #{tpu_custom_call.1} parent=119 // pred_region
                loop: start=0, step=1, limit=1
                $region136: #{tpu_custom_call.1} parent=134 // loop_pre_header
                  _
                $region137: #{tpu_custom_call.1} parent=134 // loop_header
                  %s577 = sphi 0, %s581
                  %p578 = scmp.ge.s32.totalorder %s577, 1
                  %s582 = sphi %s549, %s549
                  %s583 = sphi %s542, %s542
                $region138: #{tpu_custom_call.1} parent=134 // loop_header_branch
                  %580 = sbr.rel (%p578) target = $region142
                $region139: #{tpu_custom_call.1} parent=134 // loop_body
                  %v584 = vld [vmem:[%s582] sm:$0xff]
                  %585 = vst [vmem:[%s583] sm:$0xff] %v584
                  %v586 = vld [vmem:[%s582 + $0x8] sm:$0xff]
                  %587 = vst [vmem:[%s583 + $0x8] sm:$0xff] %v586
                  %v588 = vld [vmem:[%s582 + $0x100] sm:$0xff]
                  %589 = vst [vmem:[%s583 + $0x10] sm:$0xff] %v588
                  %v590 = vld [vmem:[%s582 + $0x108] sm:$0xff]
                  %591 = vst [vmem:[%s583 + $0x18] sm:$0xff] %v590
                $region140: #{tpu_custom_call.1} parent=134 // loop_footer
                  %s581 = sadd.s32 1, %s577
                $region141: #{tpu_custom_call.1} parent=134 // loop_footer_branch
                  %576 = sbr.rel target = $region137
                $region142: #{tpu_custom_call.1} parent=134 // loop_exit
                  _
              $region135: #{tpu_custom_call.1} parent=119 // pred_fallthru
                _
              // Predicated region
              $region143: #{tpu_custom_call.1} parent=119 // pred_check
                _
              $region144: #{tpu_custom_call.1} parent=119 // pred_check_branch
                %593 = sbr.rel target = $region146
              $region145: #{tpu_custom_call.1} parent=119 // pred_region
                _
              $region146: #{tpu_custom_call.1} parent=119 // pred_fallthru
                _
            $region120: #{tpu_custom_call.1} parent=115 // pred_fallthru
              _
            // Predicated region
            $region121: #{tpu_custom_call.1} parent=115 // pred_check
              _
            $region122: #{tpu_custom_call.1} parent=115 // pred_check_branch
              %555 = sbr.rel target = $region124
            $region123: #{tpu_custom_call.1} parent=115 // pred_region
              %s557 = ssub.s32 256, 1
              loop: start=0, step=1, limit=1
              $region125: #{tpu_custom_call.1} parent=123 // loop_pre_header
                _
              $region126: #{tpu_custom_call.1} parent=123 // loop_header
                %s559 = sphi 0, %s563
                %p560 = scmp.ge.s32.totalorder %s559, 1
                %s564 = sphi %s549, %s549
                %s565 = sphi %s542, %s542
              $region127: #{tpu_custom_call.1} parent=123 // loop_header_branch
                %562 = sbr.rel (%p560) target = $region131
              $region128: #{tpu_custom_call.1} parent=123 // loop_body
                %v566 = vld [vmem:[%s564] sm:%s557]
                %567 = vst [vmem:[%s565] sm:%s557] %v566
                %v568 = vld [vmem:[%s564 + $0x8] sm:%s557]
                %569 = vst [vmem:[%s565 + $0x8] sm:%s557] %v568
                %v570 = vld [vmem:[%s564 + $0x100] sm:%s557]
                %571 = vst [vmem:[%s565 + $0x10] sm:%s557] %v570
                %v572 = vld [vmem:[%s564 + $0x108] sm:%s557]
                %573 = vst [vmem:[%s565 + $0x18] sm:%s557] %v572
              $region129: #{tpu_custom_call.1} parent=123 // loop_footer
                %s563 = sadd.s32 1, %s559
              $region130: #{tpu_custom_call.1} parent=123 // loop_footer_branch
                %558 = sbr.rel target = $region126
              $region131: #{tpu_custom_call.1} parent=123 // loop_exit
                _
            $region124: #{tpu_custom_call.1} parent=115 // pred_fallthru
              _
          $region116: #{tpu_custom_call.1} parent=111 // pred_fallthru
            _
          %594 = vnop
        $region112: #{tpu_custom_call.1} parent=31 // pred_fallthru
          _
      $region32: #{tpu_custom_call.1} parent=5 // pred_fallthru
        _
      %p595 = scmp.le.s32.totalorder 1, %s22
      %p596 = scmp.lt.s32.totalorder %s22, 3
      %p597 = pnand %p595, %p596
      %p598 = pneg %p597
      // Predicated region
      $region147: #{tpu_custom_call.1} parent=5 // pred_check
        _
      $region148: #{tpu_custom_call.1} parent=5 // pred_check_branch
        %600 = sbr.rel (%p597) target = $region150
      $region149: #{tpu_custom_call.1} parent=5 // pred_region
        %s601 = ssub.s32 %s22, 1
        %s602 = sand.u32 %s43, 1
        %s603 = sand.u32 %s43, 1
        %s604 = smul.addr %s603, 32
        %s605 = scalar_lea.vmem [#allocation2], %s604
        // Predicated region
        $region151: #{tpu_custom_call.1} parent=149 // pred_check
          %p606 = pneg %p56
        $region152: #{tpu_custom_call.1} parent=149 // pred_check_branch
          %608 = sbr.rel (%p606) target = $region154
        $region153: #{tpu_custom_call.1} parent=149 // pred_region
          _
        $region154: #{tpu_custom_call.1} parent=149 // pred_fallthru
          _
        %s609 = sand.u32 %s69, 1
        %s610 = sand.u32 %s69, 1
        %s611 = smul.addr %s610, 256
        %s612 = scalar_lea.vmem [#allocation3], %s611
        // Predicated region
        $region155: #{tpu_custom_call.1} parent=149 // pred_check
          %p613 = pneg %p82
        $region156: #{tpu_custom_call.1} parent=149 // pred_check_branch
          %615 = sbr.rel (%p613) target = $region158
        $region157: #{tpu_custom_call.1} parent=149 // pred_region
          _
        $region158: #{tpu_custom_call.1} parent=149 // pred_fallthru
          _
        %s616 = sand.u32 %s103, 1
        %s617 = sand.u32 %s103, 1
        %s618 = smul.addr %s617, 32
        %s619 = scalar_lea.vmem [#allocation4], %s618
        // Predicated region
        $region159: #{tpu_custom_call.1} parent=149 // pred_check
          %p620 = pneg %p116
        $region160: #{tpu_custom_call.1} parent=149 // pred_check_branch
          %622 = sbr.rel (%p620) target = $region162
        $region161: #{tpu_custom_call.1} parent=149 // pred_region
          _
        $region162: #{tpu_custom_call.1} parent=149 // pred_fallthru
          _
        %s623 = sand.u32 %s43, 1
        %s624 = sand.u32 %s43, 1
        %s625 = smul.addr %s624, 32
        %s626 = scalar_lea.vmem [#allocation2], %s625
        %p627 = pneg %p56
        %p628 = pneg %p53
        %s629 = sand.u32 %s69, 1
        %s630 = sand.u32 %s69, 1
        %s631 = smul.addr %s630, 256
        %s632 = scalar_lea.vmem [#allocation3], %s631
        %p633 = pneg %p82
        %p634 = pneg %p79
        %s635 = sand.u32 %s103, 1
        %s636 = sand.u32 %s103, 1
        %s637 = smul.addr %s636, 32
        %s638 = scalar_lea.vmem [#allocation4], %s637
        %p639 = pneg %p116
        %p640 = pneg %p113
        %p641 = pneg %p137
        %p642 = pneg %p134
        %p643 = pneg %p158
        %p644 = pneg %p155
        %p645 = pneg %p179
        %p646 = pneg %p176
        %p647 = pneg %p200
        %p648 = pneg %p197
        %p649 = pneg %p226
        %p650 = pneg %p223
        %s651 = sand.u32 %s213, 1
        %s652 = sand.u32 %s213, 1
        %s653 = smul.addr %s652, 128
        %s654 = scalar_lea.vmem [#allocation5], %s653
        %p655 = pneg %p252
        %p656 = pneg %p249
        %s657 = sand.u32 %s239, 1
        %s658 = scalar_lea.sflag [#allocation7], %s657
        %s659 = sand.u32 %s239, 1
        %s660 = scalar_lea.vmem [#allocation6], %s659
        %p661 = pneg %p278
        %p662 = pneg %p275
        %s663 = sand.u32 %s265, 1
        %s664 = scalar_lea.sflag [#allocation9], %s663
        %s665 = sand.u32 %s265, 1
        %s666 = scalar_lea.vmem [#allocation8], %s665
        %s667 = smul.u32 %s27, 8
        %s668 = ssub.s32 %s667, 1
        %p669 = scmp.gt.s32.totalorder %s668, 0
        %s670 = scalar_select %p669, %s668, 0
        %s671 = smul.u32 8, %s27
        %s672 = smul.u32 %s27, 8
        %s673 = sadd.s32 %s672, 8
        %p674 = scmp.lt.s32.totalorder %s673, 15
        %s675 = scalar_select %p674, %s673, 15
        %s676 = smul.u32 8, %s27
        %v678 = vld [vmem:[%s612] sm:$0xff]
        %v679 = vld [vmem:[%s612 + $0x8] sm:$0xff]
        %v680 = vld [vmem:[%s612 + $0x10] sm:$0xff]
        %v681 = vld [vmem:[%s612 + $0x18] sm:$0xff]
        %v682 = vld [vmem:[%s612 + $0x20] sm:$0xff]
        %v683 = vld [vmem:[%s612 + $0x28] sm:$0xff]
        %v684 = vld [vmem:[%s612 + $0x30] sm:$0xff]
        %v685 = vld [vmem:[%s612 + $0x38] sm:$0xff]
        %v686 = vld [vmem:[%s612 + $0x40] sm:$0xff]
        %v687 = vld [vmem:[%s612 + $0x48] sm:$0xff]
        %v688 = vld [vmem:[%s612 + $0x50] sm:$0xff]
        %v689 = vld [vmem:[%s612 + $0x58] sm:$0xff]
        %v690 = vld [vmem:[%s612 + $0x60] sm:$0xff]
        %v691 = vld [vmem:[%s612 + $0x68] sm:$0xff]
        %v692 = vld [vmem:[%s612 + $0x70] sm:$0xff]
        %v693 = vld [vmem:[%s612 + $0x78] sm:$0xff]
        %v694 = vld [vmem:[%s612 + $0x80] sm:$0xff]
        %v695 = vld [vmem:[%s612 + $0x88] sm:$0xff]
        %v696 = vld [vmem:[%s612 + $0x90] sm:$0xff]
        %v697 = vld [vmem:[%s612 + $0x98] sm:$0xff]
        %v698 = vld [vmem:[%s612 + $0xa0] sm:$0xff]
        %v699 = vld [vmem:[%s612 + $0xa8] sm:$0xff]
        %v700 = vld [vmem:[%s612 + $0xb0] sm:$0xff]
        %v701 = vld [vmem:[%s612 + $0xb8] sm:$0xff]
        %v702 = vld [vmem:[%s612 + $0xc0] sm:$0xff]
        %v703 = vld [vmem:[%s612 + $0xc8] sm:$0xff]
        %v704 = vld [vmem:[%s612 + $0xd0] sm:$0xff]
        %v705 = vld [vmem:[%s612 + $0xd8] sm:$0xff]
        %v706 = vld [vmem:[%s612 + $0xe0] sm:$0xff]
        %v707 = vld [vmem:[%s612 + $0xe8] sm:$0xff]
        %v708 = vld [vmem:[%s612 + $0xf0] sm:$0xff]
        %v709 = vld [vmem:[%s612 + $0xf8] sm:$0xff]
        %v710 = vpack.c.bf16 %v679, %v678
        %v711 = vpack.c.bf16 %v681, %v680
        %v712 = vpack.c.bf16 %v683, %v682
        %v713 = vpack.c.bf16 %v685, %v684
        %v714 = vpack.c.bf16 %v687, %v686
        %v715 = vpack.c.bf16 %v689, %v688
        %v716 = vpack.c.bf16 %v691, %v690
        %v717 = vpack.c.bf16 %v693, %v692
        %v718 = vpack.c.bf16 %v695, %v694
        %v719 = vpack.c.bf16 %v697, %v696
        %v720 = vpack.c.bf16 %v699, %v698
        %v721 = vpack.c.bf16 %v701, %v700
        %v722 = vpack.c.bf16 %v703, %v702
        %v723 = vpack.c.bf16 %v705, %v704
        %v724 = vpack.c.bf16 %v707, %v706
        %v725 = vpack.c.bf16 %v709, %v708
        %p726 = scmp.gt.s32.totalorder %s27, 0
        %v727 = vld [vmem:[%s605] sm:$0xff]
        %v728 = vld [vmem:[%s605 + $0x8] sm:$0xff]
        %v729 = vld [vmem:[%s605 + $0x10] sm:$0xff]
        %v730 = vld [vmem:[%s605 + $0x18] sm:$0xff]
        %s731 = scalar_select %p726, 1, 0
        %v732 = vstv %s731
        %vm733 = vcmp.eq.s32.totalorder %v732, 1
        %v734 = vsel %vm733, %v727, 0.0
        %v735 = vsel %vm733, %v728, 0.0
        %v736 = vsel %vm733, %v729, 0.0
        %v737 = vsel %vm733, %v730, 0.0
        %v738 = vpack.c.bf16 %v735, %v734
        %v739 = vpack.c.bf16 %v737, %v736
        %p740 = scmp.lt.s32.totalorder %s27, 1
        %v741 = vld [vmem:[%s619] sm:$0xff]
        %v742 = vld [vmem:[%s619 + $0x8] sm:$0xff]
        %v743 = vld [vmem:[%s619 + $0x10] sm:$0xff]
        %v744 = vld [vmem:[%s619 + $0x18] sm:$0xff]
        %s745 = scalar_select %p740, 1, 0
        %v746 = vstv %s745
        %vm747 = vcmp.eq.s32.totalorder %v746, 1
        %v748 = vsel %vm747, %v741, 0.0
        %v749 = vsel %vm747, %v742, 0.0
        %v750 = vsel %vm747, %v743, 0.0
        %v751 = vsel %vm747, %v744, 0.0
        %v752 = vpack.c.bf16 %v749, %v748
        %v753 = vpack.c.bf16 %v751, %v750
        %v755 = vshrl.u32 %v738, 16
        %v757 = vrot.slane %v755, 7
        %v758 = vshll.u32 %v738, 16
        %v760 = vor.u32 %v757, %v758
        %v762 = vshrl.u32 %v710, 16
        %v764 = vrot.slane %v762, 7
        %v765 = vshll.u32 %v710, 16
        %v767 = vor.u32 %v764, %v765
        %v769 = vshrl.u32 %v711, 16
        %v771 = vrot.slane %v769, 7
        %v772 = vshll.u32 %v711, 16
        %v774 = vor.u32 %v771, %v772
        %v776 = vshrl.u32 %v712, 16
        %v778 = vrot.slane %v776, 7
        %v779 = vshll.u32 %v712, 16
        %v781 = vor.u32 %v778, %v779
        %v783 = vshrl.u32 %v713, 16
        %v785 = vrot.slane %v783, 7
        %v786 = vshll.u32 %v713, 16
        %v788 = vor.u32 %v785, %v786
        %v790 = vshrl.u32 %v714, 16
        %v792 = vrot.slane %v790, 7
        %v793 = vshll.u32 %v714, 16
        %v795 = vor.u32 %v792, %v793
        %v797 = vshrl.u32 %v715, 16
        %v799 = vrot.slane %v797, 7
        %v800 = vshll.u32 %v715, 16
        %v802 = vor.u32 %v799, %v800
        %v804 = vshrl.u32 %v716, 16
        %v806 = vrot.slane %v804, 7
        %v807 = vshll.u32 %v716, 16
        %v809 = vor.u32 %v806, %v807
        %v811 = vshrl.u32 %v717, 16
        %v813 = vrot.slane %v811, 7
        %v814 = vshll.u32 %v717, 16
        %v816 = vor.u32 %v813, %v814
        %v818 = vshrl.u32 %v752, 16
        %v820 = vrot.slane %v818, 7
        %v821 = vshll.u32 %v752, 16
        %v823 = vor.u32 %v820, %v821
        %v825 = vshrl.u32 %v739, 16
        %v827 = vrot.slane %v825, 7
        %v828 = vshll.u32 %v739, 16
        %v830 = vor.u32 %v827, %v828
        %v832 = vshrl.u32 %v718, 16
        %v834 = vrot.slane %v832, 7
        %v835 = vshll.u32 %v718, 16
        %v837 = vor.u32 %v834, %v835
        %v839 = vshrl.u32 %v719, 16
        %v841 = vrot.slane %v839, 7
        %v842 = vshll.u32 %v719, 16
        %v844 = vor.u32 %v841, %v842
        %v846 = vshrl.u32 %v720, 16
        %v848 = vrot.slane %v846, 7
        %v849 = vshll.u32 %v720, 16
        %v851 = vor.u32 %v848, %v849
        %v853 = vshrl.u32 %v721, 16
        %v855 = vrot.slane %v853, 7
        %v856 = vshll.u32 %v721, 16
        %v858 = vor.u32 %v855, %v856
        %v860 = vshrl.u32 %v722, 16
        %v862 = vrot.slane %v860, 7
        %v863 = vshll.u32 %v722, 16
        %v865 = vor.u32 %v862, %v863
        %v867 = vshrl.u32 %v723, 16
        %v869 = vrot.slane %v867, 7
        %v870 = vshll.u32 %v723, 16
        %v872 = vor.u32 %v869, %v870
        %v874 = vshrl.u32 %v724, 16
        %v876 = vrot.slane %v874, 7
        %v877 = vshll.u32 %v724, 16
        %v879 = vor.u32 %v876, %v877
        %v881 = vshrl.u32 %v725, 16
        %v883 = vrot.slane %v881, 7
        %v884 = vshll.u32 %v725, 16
        %v886 = vor.u32 %v883, %v884
        %v888 = vshrl.u32 %v753, 16
        %v890 = vrot.slane %v888, 7
        %v891 = vshll.u32 %v753, 16
        %v893 = vor.u32 %v890, %v891
        %vm934 = vcmask 1040384
        %vm935 = vsmask.f32 256
        %vm936 = vmand %vm934, %vm935
        %v937 = vsel %vm936, 0, %v760
        %v938 = vsel %vm936, 0, %v767
        %v939 = vsel %vm936, 0, %v774
        %v940 = vsel %vm936, 0, %v781
        %v941 = vsel %vm936, 0, %v788
        %v942 = vsel %vm936, 0, %v795
        %v943 = vsel %vm936, 0, %v802
        %v944 = vsel %vm936, 0, %v809
        %v945 = vsel %vm936, 0, %v816
        %v946 = vsel %vm936, 0, %v823
        %v947 = vsel %vm936, 0, %v830
        %v948 = vsel %vm936, 0, %v837
        %v949 = vsel %vm936, 0, %v844
        %v950 = vsel %vm936, 0, %v851
        %v951 = vsel %vm936, 0, %v858
        %v952 = vsel %vm936, 0, %v865
        %v953 = vsel %vm936, 0, %v872
        %v954 = vsel %vm936, 0, %v879
        %v955 = vsel %vm936, 0, %v886
        %v956 = vsel %vm936, 0, %v893
        %v957 = vsel %vm936, %v757, 0
        %v958 = vsel %vm936, %v764, 0
        %v959 = vsel %vm936, %v771, 0
        %v960 = vsel %vm936, %v778, 0
        %v961 = vsel %vm936, %v785, 0
        %v962 = vsel %vm936, %v792, 0
        %v963 = vsel %vm936, %v799, 0
        %v964 = vsel %vm936, %v806, 0
        %v965 = vsel %vm936, %v813, 0
        %v966 = vsel %vm936, %v820, 0
        %v967 = vsel %vm936, %v827, 0
        %v968 = vsel %vm936, %v834, 0
        %v969 = vsel %vm936, %v841, 0
        %v970 = vsel %vm936, %v848, 0
        %v971 = vsel %vm936, %v855, 0
        %v972 = vsel %vm936, %v862, 0
        %v973 = vsel %vm936, %v869, 0
        %v974 = vsel %vm936, %v876, 0
        %v975 = vsel %vm936, %v883, 0
        %v976 = vsel %vm936, %v890, 0
        %vm977 = vsmask.f32 7424
        %v979 = vshrl.u32 %v937, 16
        %v981 = vshll.u32 %v937, 16
        %v983 = vrot.slane %v981, 1
        %v984 = vor.u32 %v979, %v983
        %v986 = vshll.u32 %v957, 16
        %v988 = vrot.slane %v986, 1
        %v989 = vsel %vm977, %v984, %v988
        %v991 = vshrl.u32 %v938, 16
        %v993 = vshll.u32 %v938, 16
        %v995 = vrot.slane %v993, 1
        %v996 = vor.u32 %v991, %v995
        %v998 = vshll.u32 %v958, 16
        %v1000 = vrot.slane %v998, 1
        %v1001 = vsel %vm977, %v996, %v1000
        %v1003 = vshrl.u32 %v939, 16
        %v1005 = vshll.u32 %v939, 16
        %v1007 = vrot.slane %v1005, 1
        %v1008 = vor.u32 %v1003, %v1007
        %v1010 = vshll.u32 %v959, 16
        %v1012 = vrot.slane %v1010, 1
        %v1013 = vsel %vm977, %v1008, %v1012
        %v1015 = vshrl.u32 %v940, 16
        %v1017 = vshll.u32 %v940, 16
        %v1019 = vrot.slane %v1017, 1
        %v1020 = vor.u32 %v1015, %v1019
        %v1022 = vshll.u32 %v960, 16
        %v1024 = vrot.slane %v1022, 1
        %v1025 = vsel %vm977, %v1020, %v1024
        %v1027 = vshrl.u32 %v941, 16
        %v1029 = vshll.u32 %v941, 16
        %v1031 = vrot.slane %v1029, 1
        %v1032 = vor.u32 %v1027, %v1031
        %v1034 = vshll.u32 %v961, 16
        %v1036 = vrot.slane %v1034, 1
        %v1037 = vsel %vm977, %v1032, %v1036
        %v1039 = vshrl.u32 %v942, 16
        %v1041 = vshll.u32 %v942, 16
        %v1043 = vrot.slane %v1041, 1
        %v1044 = vor.u32 %v1039, %v1043
        %v1046 = vshll.u32 %v962, 16
        %v1048 = vrot.slane %v1046, 1
        %v1049 = vsel %vm977, %v1044, %v1048
        %v1051 = vshrl.u32 %v943, 16
        %v1053 = vshll.u32 %v943, 16
        %v1055 = vrot.slane %v1053, 1
        %v1056 = vor.u32 %v1051, %v1055
        %v1058 = vshll.u32 %v963, 16
        %v1060 = vrot.slane %v1058, 1
        %v1061 = vsel %vm977, %v1056, %v1060
        %v1063 = vshrl.u32 %v944, 16
        %v1065 = vshll.u32 %v944, 16
        %v1067 = vrot.slane %v1065, 1
        %v1068 = vor.u32 %v1063, %v1067
        %v1070 = vshll.u32 %v964, 16
        %v1072 = vrot.slane %v1070, 1
        %v1073 = vsel %vm977, %v1068, %v1072
        %v1075 = vshrl.u32 %v947, 16
        %v1077 = vshll.u32 %v947, 16
        %v1079 = vrot.slane %v1077, 1
        %v1080 = vor.u32 %v1075, %v1079
        %v1082 = vshll.u32 %v967, 16
        %v1084 = vrot.slane %v1082, 1
        %v1085 = vsel %vm977, %v1080, %v1084
        %v1087 = vshrl.u32 %v948, 16
        %v1089 = vshll.u32 %v948, 16
        %v1091 = vrot.slane %v1089, 1
        %v1092 = vor.u32 %v1087, %v1091
        %v1094 = vshll.u32 %v968, 16
        %v1096 = vrot.slane %v1094, 1
        %v1097 = vsel %vm977, %v1092, %v1096
        %v1099 = vshrl.u32 %v949, 16
        %v1101 = vshll.u32 %v949, 16
        %v1103 = vrot.slane %v1101, 1
        %v1104 = vor.u32 %v1099, %v1103
        %v1106 = vshll.u32 %v969, 16
        %v1108 = vrot.slane %v1106, 1
        %v1109 = vsel %vm977, %v1104, %v1108
        %v1111 = vshrl.u32 %v950, 16
        %v1113 = vshll.u32 %v950, 16
        %v1115 = vrot.slane %v1113, 1
        %v1116 = vor.u32 %v1111, %v1115
        %v1118 = vshll.u32 %v970, 16
        %v1120 = vrot.slane %v1118, 1
        %v1121 = vsel %vm977, %v1116, %v1120
        %v1123 = vshrl.u32 %v951, 16
        %v1125 = vshll.u32 %v951, 16
        %v1127 = vrot.slane %v1125, 1
        %v1128 = vor.u32 %v1123, %v1127
        %v1130 = vshll.u32 %v971, 16
        %v1132 = vrot.slane %v1130, 1
        %v1133 = vsel %vm977, %v1128, %v1132
        %v1135 = vshrl.u32 %v952, 16
        %v1137 = vshll.u32 %v952, 16
        %v1139 = vrot.slane %v1137, 1
        %v1140 = vor.u32 %v1135, %v1139
        %v1142 = vshll.u32 %v972, 16
        %v1144 = vrot.slane %v1142, 1
        %v1145 = vsel %vm977, %v1140, %v1144
        %v1147 = vshrl.u32 %v953, 16
        %v1149 = vshll.u32 %v953, 16
        %v1151 = vrot.slane %v1149, 1
        %v1152 = vor.u32 %v1147, %v1151
        %v1154 = vshll.u32 %v973, 16
        %v1156 = vrot.slane %v1154, 1
        %v1157 = vsel %vm977, %v1152, %v1156
        %v1159 = vshrl.u32 %v954, 16
        %v1161 = vshll.u32 %v954, 16
        %v1163 = vrot.slane %v1161, 1
        %v1164 = vor.u32 %v1159, %v1163
        %v1166 = vshll.u32 %v974, 16
        %v1168 = vrot.slane %v1166, 1
        %v1169 = vsel %vm977, %v1164, %v1168
        %1170 = vrot.lane.b32.xlu0 %v989, 4
        %v1171 = vpop.permute.xlu0 %1170
        %1172 = vrot.lane.b32.xlu0 %v1001, 4
        %v1173 = vpop.permute.xlu0 %1172
        %1174 = vrot.lane.b32.xlu0 %v1013, 4
        %v1175 = vpop.permute.xlu0 %1174
        %1176 = vrot.lane.b32.xlu0 %v1025, 4
        %v1177 = vpop.permute.xlu0 %1176
        %1178 = vrot.lane.b32.xlu0 %v1037, 4
        %v1179 = vpop.permute.xlu0 %1178
        %1180 = vrot.lane.b32.xlu0 %v1049, 4
        %v1181 = vpop.permute.xlu0 %1180
        %1182 = vrot.lane.b32.xlu0 %v1061, 4
        %v1183 = vpop.permute.xlu0 %1182
        %1184 = vrot.lane.b32.xlu0 %v1073, 4
        %v1185 = vpop.permute.xlu0 %1184
        %1186 = vrot.lane.b32.xlu0 %v1085, 4
        %v1187 = vpop.permute.xlu0 %1186
        %1188 = vrot.lane.b32.xlu0 %v1097, 4
        %v1189 = vpop.permute.xlu0 %1188
        %1190 = vrot.lane.b32.xlu0 %v1109, 4
        %v1191 = vpop.permute.xlu0 %1190
        %1192 = vrot.lane.b32.xlu0 %v1121, 4
        %v1193 = vpop.permute.xlu0 %1192
        %1194 = vrot.lane.b32.xlu0 %v1133, 4
        %v1195 = vpop.permute.xlu0 %1194
        %1196 = vrot.lane.b32.xlu0 %v1145, 4
        %v1197 = vpop.permute.xlu0 %1196
        %1198 = vrot.lane.b32.xlu0 %v1157, 4
        %v1199 = vpop.permute.xlu0 %1198
        %1200 = vrot.lane.b32.xlu0 %v1169, 4
        %v1201 = vpop.permute.xlu0 %1200
        %vm1234 = vcmask 1046528
        %v1235 = vrot.slane %v937, 1
        %v1236 = vrot.slane %v957, 1
        %v1237 = vsel %vm1234, %v1235, %v1236
        %v1238 = vrot.slane %v938, 1
        %v1239 = vrot.slane %v958, 1
        %v1240 = vsel %vm1234, %v1238, %v1239
        %v1241 = vrot.slane %v939, 1
        %v1242 = vrot.slane %v959, 1
        %v1243 = vsel %vm1234, %v1241, %v1242
        %v1244 = vrot.slane %v940, 1
        %v1245 = vrot.slane %v960, 1
        %v1246 = vsel %vm1234, %v1244, %v1245
        %v1247 = vrot.slane %v941, 1
        %v1248 = vrot.slane %v961, 1
        %v1249 = vsel %vm1234, %v1247, %v1248
        %v1250 = vrot.slane %v942, 1
        %v1251 = vrot.slane %v962, 1
        %v1252 = vsel %vm1234, %v1250, %v1251
        %v1253 = vrot.slane %v943, 1
        %v1254 = vrot.slane %v963, 1
        %v1255 = vsel %vm1234, %v1253, %v1254
        %v1256 = vrot.slane %v944, 1
        %v1257 = vrot.slane %v964, 1
        %v1258 = vsel %vm1234, %v1256, %v1257
        %v1259 = vrot.slane %v947, 1
        %v1260 = vrot.slane %v967, 1
        %v1261 = vsel %vm1234, %v1259, %v1260
        %v1262 = vrot.slane %v948, 1
        %v1263 = vrot.slane %v968, 1
        %v1264 = vsel %vm1234, %v1262, %v1263
        %v1265 = vrot.slane %v949, 1
        %v1266 = vrot.slane %v969, 1
        %v1267 = vsel %vm1234, %v1265, %v1266
        %v1268 = vrot.slane %v950, 1
        %v1269 = vrot.slane %v970, 1
        %v1270 = vsel %vm1234, %v1268, %v1269
        %v1271 = vrot.slane %v951, 1
        %v1272 = vrot.slane %v971, 1
        %v1273 = vsel %vm1234, %v1271, %v1272
        %v1274 = vrot.slane %v952, 1
        %v1275 = vrot.slane %v972, 1
        %v1276 = vsel %vm1234, %v1274, %v1275
        %v1277 = vrot.slane %v953, 1
        %v1278 = vrot.slane %v973, 1
        %v1279 = vsel %vm1234, %v1277, %v1278
        %v1280 = vrot.slane %v954, 1
        %v1281 = vrot.slane %v974, 1
        %v1282 = vsel %vm1234, %v1280, %v1281
        %1283 = vrot.lane.b32.xlu0 %v1237, 8
        %v1284 = vpop.permute.xlu0 %1283
        %1285 = vrot.lane.b32.xlu0 %v1240, 8
        %v1286 = vpop.permute.xlu0 %1285
        %1287 = vrot.lane.b32.xlu0 %v1243, 8
        %v1288 = vpop.permute.xlu0 %1287
        %1289 = vrot.lane.b32.xlu0 %v1246, 8
        %v1290 = vpop.permute.xlu0 %1289
        %1291 = vrot.lane.b32.xlu0 %v1249, 8
        %v1292 = vpop.permute.xlu0 %1291
        %1293 = vrot.lane.b32.xlu0 %v1252, 8
        %v1294 = vpop.permute.xlu0 %1293
        %1295 = vrot.lane.b32.xlu0 %v1255, 8
        %v1296 = vpop.permute.xlu0 %1295
        %1297 = vrot.lane.b32.xlu0 %v1258, 8
        %v1298 = vpop.permute.xlu0 %1297
        %1299 = vrot.lane.b32.xlu0 %v1261, 8
        %v1300 = vpop.permute.xlu0 %1299
        %1301 = vrot.lane.b32.xlu0 %v1264, 8
        %v1302 = vpop.permute.xlu0 %1301
        %1303 = vrot.lane.b32.xlu0 %v1267, 8
        %v1304 = vpop.permute.xlu0 %1303
        %1305 = vrot.lane.b32.xlu0 %v1270, 8
        %v1306 = vpop.permute.xlu0 %1305
        %1307 = vrot.lane.b32.xlu0 %v1273, 8
        %v1308 = vpop.permute.xlu0 %1307
        %1309 = vrot.lane.b32.xlu0 %v1276, 8
        %v1310 = vpop.permute.xlu0 %1309
        %1311 = vrot.lane.b32.xlu0 %v1279, 8
        %v1312 = vpop.permute.xlu0 %1311
        %1313 = vrot.lane.b32.xlu0 %v1282, 8
        %v1314 = vpop.permute.xlu0 %1313
        %vm1315 = vcmask 31744
        %v1317 = vsel %vm1315, %v937, %v1171
        %v1319 = vsel %vm1315, %v938, %v1173
        %v1321 = vsel %vm1315, %v939, %v1175
        %v1323 = vsel %vm1315, %v940, %v1177
        %v1325 = vsel %vm1315, %v941, %v1179
        %v1327 = vsel %vm1315, %v942, %v1181
        %v1329 = vsel %vm1315, %v943, %v1183
        %v1331 = vsel %vm1315, %v944, %v1185
        %v1333 = vsel %vm1315, %v947, %v1187
        %v1335 = vsel %vm1315, %v948, %v1189
        %v1337 = vsel %vm1315, %v949, %v1191
        %v1339 = vsel %vm1315, %v950, %v1193
        %v1341 = vsel %vm1315, %v951, %v1195
        %v1343 = vsel %vm1315, %v952, %v1197
        %v1345 = vsel %vm1315, %v953, %v1199
        %v1347 = vsel %vm1315, %v954, %v1201
        %vm1348 = vcmask 64512
        %v1350 = vsel %vm1348, %v1317, %v1284
        %v1352 = vsel %vm1348, %v1319, %v1286
        %v1354 = vsel %vm1348, %v1321, %v1288
        %v1356 = vsel %vm1348, %v1323, %v1290
        %v1358 = vsel %vm1348, %v1325, %v1292
        %v1360 = vsel %vm1348, %v1327, %v1294
        %v1362 = vsel %vm1348, %v1329, %v1296
        %v1364 = vsel %vm1348, %v1331, %v1298
        %v1366 = vsel %vm1348, %v1333, %v1300
        %v1368 = vsel %vm1348, %v1335, %v1302
        %v1370 = vsel %vm1348, %v1337, %v1304
        %v1372 = vsel %vm1348, %v1339, %v1306
        %v1374 = vsel %vm1348, %v1341, %v1308
        %v1376 = vsel %vm1348, %v1343, %v1310
        %v1378 = vsel %vm1348, %v1345, %v1312
        %v1380 = vsel %vm1348, %v1347, %v1314
        %v1381 = vld [vmem:[%s5] sm:$0xf]
        %v1382 = vld [vmem:[%s5 + $0x4] sm:$0x3]
        %v1384 = vshrl.u32 %v945, 16
        %v1386 = vshll.u32 %v945, 16
        %v1388 = vrot.slane %v1386, 1
        %v1389 = vor.u32 %v1384, %v1388
        %v1391 = vshll.u32 %v965, 16
        %v1393 = vrot.slane %v1391, 1
        %v1394 = vsel %vm977, %v1389, %v1393
        %v1396 = vshrl.u32 %v955, 16
        %v1398 = vshll.u32 %v955, 16
        %v1400 = vrot.slane %v1398, 1
        %v1401 = vor.u32 %v1396, %v1400
        %v1403 = vshll.u32 %v975, 16
        %v1405 = vrot.slane %v1403, 1
        %v1406 = vsel %vm977, %v1401, %v1405
        %1407 = vrot.lane.b32.xlu0 %v1394, 4
        %v1408 = vpop.permute.xlu0 %1407
        %1409 = vrot.lane.b32.xlu0 %v1406, 4
        %v1410 = vpop.permute.xlu0 %1409
        %v1415 = vrot.slane %v945, 1
        %v1416 = vrot.slane %v965, 1
        %v1417 = vsel %vm1234, %v1415, %v1416
        %v1418 = vrot.slane %v955, 1
        %v1419 = vrot.slane %v975, 1
        %v1420 = vsel %vm1234, %v1418, %v1419
        %1421 = vrot.lane.b32.xlu0 %v1417, 8
        %v1422 = vpop.permute.xlu0 %1421
        %1423 = vrot.lane.b32.xlu0 %v1420, 8
        %v1424 = vpop.permute.xlu0 %1423
        %v1426 = vsel %vm1315, %v945, %v1408
        %v1428 = vsel %vm1315, %v955, %v1410
        %v1430 = vsel %vm1348, %v1426, %v1422
        %v1432 = vsel %vm1348, %v1428, %v1424
        %s1433 = scalar_lea.vmem %s5, 8
        %v1434 = vld [vmem:[%s1433] sm:$0xf]
        %v1435 = vld [vmem:[%s1433 + $0x4] sm:$0x3]
        %v1438 = vunpack.c.l.b16 %v1434
        %v1439 = vunpack.c.l.b16 %v1435
        %v1440 = vpack.c.b16 %v1439, %v1438
        %vm1441 = vcmask 97280
        %v1442 = vsel %vm1441, %v1352, 0
        %v1444 = vsel %vm1441, %v1354, 0
        %v1446 = vsel %vm1441, %v1356, 0
        %v1448 = vsel %vm1441, %v1358, 0
        %v1450 = vsel %vm1441, %v1360, 0
        %v1452 = vsel %vm1441, %v1362, 0
        %v1454 = vsel %vm1441, %v1364, 0
        %v1456 = vsel %vm1441, %v1430, 0
        %v1458 = vsel %vm1441, %v1368, 0
        %v1460 = vsel %vm1441, %v1370, 0
        %v1462 = vsel %vm1441, %v1372, 0
        %v1464 = vsel %vm1441, %v1374, 0
        %v1466 = vsel %vm1441, %v1376, 0
        %v1468 = vsel %vm1441, %v1378, 0
        %v1470 = vsel %vm1441, %v1380, 0
        %v1472 = vsel %vm1441, %v1432, 0
        %vm1474 = vcmask 1045504
        %v1476 = vsel %vm1474, %v1440, 0
        %1478 = vmatprep.subr.bf16.mxu0 0
        %1479 = vmatpush1.bf16.msra.mxu0 0
        %1480 = vmatprep.subr.bf16.mxu0 0
        %1481 = vmatpush1.bf16.msra.mxu0 0
        %1482 = vmatprep.subr.bf16.mxu0 0
        %1483 = vmatpush1.bf16.msra.mxu0 0
        %1484 = vmatprep.subr.bf16.mxu0 0
        %1485 = vmatpush1.bf16.msra.mxu0 0
        %1486 = vmatprep.subr.bf16.mxu0 0
        %1487 = vmatpush1.bf16.msra.mxu0 0
        %1488 = vmatprep.subr.bf16.mxu0 0
        %1489 = vmatpush1.bf16.msra.mxu0 0
        %1490 = vmatprep.subr.bf16.mxu0 0
        %1491 = vmatpush1.bf16.msra.mxu0 0
        %1492 = vmatprep.subr.bf16.mxu0 0
        %1493 = vmatpush1.bf16.msra.mxu0 %v1476
        %1494 = vmatprep.subr.bf16.mxu0 0
        %1495 = vmatpush2.bf16.msra.mxu0 0
        %1496 = vmatprep.subr.bf16.mxu0 0
        %1497 = vmatpush2.bf16.msra.mxu0 0
        %1498 = vmatprep.subr.bf16.mxu0 0
        %1499 = vmatpush2.bf16.msra.mxu0 0
        %1500 = vmatprep.subr.bf16.mxu0 0
        %1501 = vmatpush2.bf16.msra.mxu0 0
        %1502 = vmatprep.subr.bf16.mxu0 0
        %1503 = vmatpush2.bf16.msra.mxu0 0
        %1504 = vmatprep.subr.bf16.mxu0 0
        %1505 = vmatpush2.bf16.msra.mxu0 0
        %1506 = vmatprep.subr.bf16.mxu0 0
        %1507 = vmatpush2.bf16.msra.mxu0 0
        %1508 = vmatprep.subr.bf16.mxu0 0
        %1509 = vmatpush2.bf16.msra.mxu0 0
        %1510 = vmatprep.mubr.bf16.mxu0 0
        %1511 = vmatmul.mubr.bf16.gmra.mxu0 %v1442
        %v1512 = vpop.f32.mrf.mxu0
        %v1513 = vadd.f32 0.0, %v1512
        %v1514 = vpop.f32.mrf.mxu0
        %v1515 = vpop.f32.mrf.mxu0
        %v1516 = vadd.f32 0.0, %v1515
        %v1517 = vpop.f32.mrf.mxu0
        %1518 = vmatprep.mubr.bf16.mxu0 0
        %1519 = vmatmul.mubr.bf16.gmra.mxu0 %v1444
        %v1520 = vpop.f32.mrf.mxu0
        %v1521 = vadd.f32 0.0, %v1520
        %v1522 = vpop.f32.mrf.mxu0
        %v1523 = vpop.f32.mrf.mxu0
        %v1524 = vadd.f32 0.0, %v1523
        %v1525 = vpop.f32.mrf.mxu0
        %1526 = vmatprep.mubr.bf16.mxu0 0
        %1527 = vmatmul.mubr.bf16.gmra.mxu0 %v1446
        %v1528 = vpop.f32.mrf.mxu0
        %v1529 = vadd.f32 0.0, %v1528
        %v1530 = vpop.f32.mrf.mxu0
        %v1531 = vpop.f32.mrf.mxu0
        %v1532 = vadd.f32 0.0, %v1531
        %v1533 = vpop.f32.mrf.mxu0
        %1534 = vmatprep.mubr.bf16.mxu0 0
        %1535 = vmatmul.mubr.bf16.gmra.mxu0 %v1448
        %v1536 = vpop.f32.mrf.mxu0
        %v1537 = vadd.f32 0.0, %v1536
        %v1538 = vpop.f32.mrf.mxu0
        %v1539 = vpop.f32.mrf.mxu0
        %v1540 = vadd.f32 0.0, %v1539
        %v1541 = vpop.f32.mrf.mxu0
        %1542 = vmatprep.mubr.bf16.mxu0 0
        %1543 = vmatmul.mubr.bf16.gmra.mxu0 %v1450
        %v1544 = vpop.f32.mrf.mxu0
        %v1545 = vadd.f32 0.0, %v1544
        %v1546 = vpop.f32.mrf.mxu0
        %v1547 = vpop.f32.mrf.mxu0
        %v1548 = vadd.f32 0.0, %v1547
        %v1549 = vpop.f32.mrf.mxu0
        %1550 = vmatprep.mubr.bf16.mxu0 0
        %1551 = vmatmul.mubr.bf16.gmra.mxu0 %v1452
        %v1552 = vpop.f32.mrf.mxu0
        %v1553 = vadd.f32 0.0, %v1552
        %v1554 = vpop.f32.mrf.mxu0
        %v1555 = vpop.f32.mrf.mxu0
        %v1556 = vadd.f32 0.0, %v1555
        %v1557 = vpop.f32.mrf.mxu0
        %1558 = vmatprep.mubr.bf16.mxu0 0
        %1559 = vmatmul.mubr.bf16.gmra.mxu0 %v1454
        %v1560 = vpop.f32.mrf.mxu0
        %v1561 = vadd.f32 0.0, %v1560
        %v1562 = vpop.f32.mrf.mxu0
        %v1563 = vpop.f32.mrf.mxu0
        %v1564 = vadd.f32 0.0, %v1563
        %v1565 = vpop.f32.mrf.mxu0
        %1566 = vmatprep.mubr.bf16.mxu0 0
        %1567 = vmatmul.mubr.bf16.gmra.mxu0 %v1456
        %v1568 = vpop.f32.mrf.mxu0
        %v1569 = vadd.f32 0.0, %v1568
        %v1570 = vpop.f32.mrf.mxu0
        %v1571 = vpop.f32.mrf.mxu0
        %v1572 = vadd.f32 0.0, %v1571
        %v1573 = vpop.f32.mrf.mxu0
        %1574 = vmatprep.mubr.bf16.mxu0 0
        %1575 = vmatmul.mubr.bf16.gmra.mxu0 %v1458
        %v1576 = vpop.f32.mrf.mxu0
        %v1577 = vadd.f32 0.0, %v1576
        %v1578 = vpop.f32.mrf.mxu0
        %v1579 = vpop.f32.mrf.mxu0
        %v1580 = vadd.f32 0.0, %v1579
        %v1581 = vpop.f32.mrf.mxu0
        %1582 = vmatprep.mubr.bf16.mxu0 0
        %1583 = vmatmul.mubr.bf16.gmra.mxu0 %v1460
        %v1584 = vpop.f32.mrf.mxu0
        %v1585 = vadd.f32 0.0, %v1584
        %v1586 = vpop.f32.mrf.mxu0
        %v1587 = vpop.f32.mrf.mxu0
        %v1588 = vadd.f32 0.0, %v1587
        %v1589 = vpop.f32.mrf.mxu0
        %1590 = vmatprep.mubr.bf16.mxu0 0
        %1591 = vmatmul.mubr.bf16.gmra.mxu0 %v1462
        %v1592 = vpop.f32.mrf.mxu0
        %v1593 = vadd.f32 0.0, %v1592
        %v1594 = vpop.f32.mrf.mxu0
        %v1595 = vpop.f32.mrf.mxu0
        %v1596 = vadd.f32 0.0, %v1595
        %v1597 = vpop.f32.mrf.mxu0
        %1598 = vmatprep.mubr.bf16.mxu0 0
        %1599 = vmatmul.mubr.bf16.gmra.mxu0 %v1464
        %v1600 = vpop.f32.mrf.mxu0
        %v1601 = vadd.f32 0.0, %v1600
        %v1602 = vpop.f32.mrf.mxu0
        %v1603 = vpop.f32.mrf.mxu0
        %v1604 = vadd.f32 0.0, %v1603
        %v1605 = vpop.f32.mrf.mxu0
        %1606 = vmatprep.mubr.bf16.mxu0 0
        %1607 = vmatmul.mubr.bf16.gmra.mxu0 %v1466
        %v1608 = vpop.f32.mrf.mxu0
        %v1609 = vadd.f32 0.0, %v1608
        %v1610 = vpop.f32.mrf.mxu0
        %v1611 = vpop.f32.mrf.mxu0
        %v1612 = vadd.f32 0.0, %v1611
        %v1613 = vpop.f32.mrf.mxu0
        %1614 = vmatprep.mubr.bf16.mxu0 0
        %1615 = vmatmul.mubr.bf16.gmra.mxu0 %v1468
        %v1616 = vpop.f32.mrf.mxu0
        %v1617 = vadd.f32 0.0, %v1616
        %v1618 = vpop.f32.mrf.mxu0
        %v1619 = vpop.f32.mrf.mxu0
        %v1620 = vadd.f32 0.0, %v1619
        %v1621 = vpop.f32.mrf.mxu0
        %1622 = vmatprep.mubr.bf16.mxu0 0
        %1623 = vmatmul.mubr.bf16.gmra.mxu0 %v1470
        %v1624 = vpop.f32.mrf.mxu0
        %v1625 = vadd.f32 0.0, %v1624
        %v1626 = vpop.f32.mrf.mxu0
        %v1627 = vpop.f32.mrf.mxu0
        %v1628 = vadd.f32 0.0, %v1627
        %v1629 = vpop.f32.mrf.mxu0
        %1630 = vmatprep.mubr.bf16.mxu0 0
        %1631 = vmatmul.mubr.bf16.gmra.mxu0 %v1472
        %v1632 = vpop.f32.mrf.mxu0
        %v1633 = vadd.f32 0.0, %v1632
        %v1634 = vpop.f32.mrf.mxu0
        %v1635 = vpop.f32.mrf.mxu0
        %v1636 = vadd.f32 0.0, %v1635
        %v1637 = vpop.f32.mrf.mxu0
        %1638 = vdwg.mxu0
        %v1641 = vunpack.c.l.b16 %v1381
        %v1642 = vunpack.c.l.b16 %v1382
        %v1643 = vpack.c.b16 %v1642, %v1641
        %v1644 = vsel %vm1441, %v1350, 0
        %v1646 = vsel %vm1441, %v1366, 0
        %v1649 = vsel %vm1474, %v1643, 0
        %1651 = vmatprep.subr.bf16.mxu0 0
        %1652 = vmatpush1.bf16.msra.mxu0 0
        %1653 = vmatprep.subr.bf16.mxu0 0
        %1654 = vmatpush1.bf16.msra.mxu0 0
        %1655 = vmatprep.subr.bf16.mxu0 0
        %1656 = vmatpush1.bf16.msra.mxu0 0
        %1657 = vmatprep.subr.bf16.mxu0 0
        %1658 = vmatpush1.bf16.msra.mxu0 0
        %1659 = vmatprep.subr.bf16.mxu0 0
        %1660 = vmatpush1.bf16.msra.mxu0 0
        %1661 = vmatprep.subr.bf16.mxu0 0
        %1662 = vmatpush1.bf16.msra.mxu0 0
        %1663 = vmatprep.subr.bf16.mxu0 0
        %1664 = vmatpush1.bf16.msra.mxu0 0
        %1665 = vmatprep.subr.bf16.mxu0 0
        %1666 = vmatpush1.bf16.msra.mxu0 %v1649
        %1667 = vmatprep.subr.bf16.mxu0 0
        %1668 = vmatpush2.bf16.msra.mxu0 0
        %1669 = vmatprep.subr.bf16.mxu0 0
        %1670 = vmatpush2.bf16.msra.mxu0 0
        %1671 = vmatprep.subr.bf16.mxu0 0
        %1672 = vmatpush2.bf16.msra.mxu0 0
        %1673 = vmatprep.subr.bf16.mxu0 0
        %1674 = vmatpush2.bf16.msra.mxu0 0
        %1675 = vmatprep.subr.bf16.mxu0 0
        %1676 = vmatpush2.bf16.msra.mxu0 0
        %1677 = vmatprep.subr.bf16.mxu0 0
        %1678 = vmatpush2.bf16.msra.mxu0 0
        %1679 = vmatprep.subr.bf16.mxu0 0
        %1680 = vmatpush2.bf16.msra.mxu0 0
        %1681 = vmatprep.subr.bf16.mxu0 0
        %1682 = vmatpush2.bf16.msra.mxu0 0
        %1683 = vmatprep.mubr.bf16.mxu0 0
        %1684 = vmatmul.mubr.bf16.gmra.mxu0 %v1644
        %v1685 = vpop.f32.mrf.mxu0
        %v1686 = vadd.f32 %v1513, %v1685
        %v1687 = vpop.f32.mrf.mxu0
        %v1688 = vpop.f32.mrf.mxu0
        %v1689 = vadd.f32 %v1516, %v1688
        %v1690 = vpop.f32.mrf.mxu0
        %1691 = vmatprep.mubr.bf16.mxu0 0
        %1692 = vmatmul.mubr.bf16.gmra.mxu0 %v1442
        %v1693 = vpop.f32.mrf.mxu0
        %v1694 = vadd.f32 %v1521, %v1693
        %v1695 = vpop.f32.mrf.mxu0
        %v1696 = vpop.f32.mrf.mxu0
        %v1697 = vadd.f32 %v1524, %v1696
        %v1698 = vpop.f32.mrf.mxu0
        %1699 = vmatprep.mubr.bf16.mxu0 0
        %1700 = vmatmul.mubr.bf16.gmra.mxu0 %v1444
        %v1701 = vpop.f32.mrf.mxu0
        %v1702 = vadd.f32 %v1529, %v1701
        %v1703 = vpop.f32.mrf.mxu0
        %v1704 = vpop.f32.mrf.mxu0
        %v1705 = vadd.f32 %v1532, %v1704
        %v1706 = vpop.f32.mrf.mxu0
        %1707 = vmatprep.mubr.bf16.mxu0 0
        %1708 = vmatmul.mubr.bf16.gmra.mxu0 %v1446
        %v1709 = vpop.f32.mrf.mxu0
        %v1710 = vadd.f32 %v1537, %v1709
        %v1711 = vpop.f32.mrf.mxu0
        %v1712 = vpop.f32.mrf.mxu0
        %v1713 = vadd.f32 %v1540, %v1712
        %v1714 = vpop.f32.mrf.mxu0
        %1715 = vmatprep.mubr.bf16.mxu0 0
        %1716 = vmatmul.mubr.bf16.gmra.mxu0 %v1448
        %v1717 = vpop.f32.mrf.mxu0
        %v1718 = vadd.f32 %v1545, %v1717
        %v1719 = vpop.f32.mrf.mxu0
        %v1720 = vpop.f32.mrf.mxu0
        %v1721 = vadd.f32 %v1548, %v1720
        %v1722 = vpop.f32.mrf.mxu0
        %1723 = vmatprep.mubr.bf16.mxu0 0
        %1724 = vmatmul.mubr.bf16.gmra.mxu0 %v1450
        %v1725 = vpop.f32.mrf.mxu0
        %v1726 = vadd.f32 %v1553, %v1725
        %v1727 = vpop.f32.mrf.mxu0
        %v1728 = vpop.f32.mrf.mxu0
        %v1729 = vadd.f32 %v1556, %v1728
        %v1730 = vpop.f32.mrf.mxu0
        %1731 = vmatprep.mubr.bf16.mxu0 0
        %1732 = vmatmul.mubr.bf16.gmra.mxu0 %v1452
        %v1733 = vpop.f32.mrf.mxu0
        %v1734 = vadd.f32 %v1561, %v1733
        %v1735 = vpop.f32.mrf.mxu0
        %v1736 = vpop.f32.mrf.mxu0
        %v1737 = vadd.f32 %v1564, %v1736
        %v1738 = vpop.f32.mrf.mxu0
        %1739 = vmatprep.mubr.bf16.mxu0 0
        %1740 = vmatmul.mubr.bf16.gmra.mxu0 %v1454
        %v1741 = vpop.f32.mrf.mxu0
        %v1742 = vadd.f32 %v1569, %v1741
        %v1743 = vpop.f32.mrf.mxu0
        %v1744 = vpop.f32.mrf.mxu0
        %v1745 = vadd.f32 %v1572, %v1744
        %v1746 = vpop.f32.mrf.mxu0
        %1747 = vmatprep.mubr.bf16.mxu0 0
        %1748 = vmatmul.mubr.bf16.gmra.mxu0 %v1646
        %v1749 = vpop.f32.mrf.mxu0
        %v1750 = vadd.f32 %v1577, %v1749
        %v1751 = vpop.f32.mrf.mxu0
        %v1752 = vpop.f32.mrf.mxu0
        %v1753 = vadd.f32 %v1580, %v1752
        %v1754 = vpop.f32.mrf.mxu0
        %1755 = vmatprep.mubr.bf16.mxu0 0
        %1756 = vmatmul.mubr.bf16.gmra.mxu0 %v1458
        %v1757 = vpop.f32.mrf.mxu0
        %v1758 = vadd.f32 %v1585, %v1757
        %v1759 = vpop.f32.mrf.mxu0
        %v1760 = vpop.f32.mrf.mxu0
        %v1761 = vadd.f32 %v1588, %v1760
        %v1762 = vpop.f32.mrf.mxu0
        %1763 = vmatprep.mubr.bf16.mxu0 0
        %1764 = vmatmul.mubr.bf16.gmra.mxu0 %v1460
        %v1765 = vpop.f32.mrf.mxu0
        %v1766 = vadd.f32 %v1593, %v1765
        %v1767 = vpop.f32.mrf.mxu0
        %v1768 = vpop.f32.mrf.mxu0
        %v1769 = vadd.f32 %v1596, %v1768
        %v1770 = vpop.f32.mrf.mxu0
        %1771 = vmatprep.mubr.bf16.mxu0 0
        %1772 = vmatmul.mubr.bf16.gmra.mxu0 %v1462
        %v1773 = vpop.f32.mrf.mxu0
        %v1774 = vadd.f32 %v1601, %v1773
        %v1775 = vpop.f32.mrf.mxu0
        %v1776 = vpop.f32.mrf.mxu0
        %v1777 = vadd.f32 %v1604, %v1776
        %v1778 = vpop.f32.mrf.mxu0
        %1779 = vmatprep.mubr.bf16.mxu0 0
        %1780 = vmatmul.mubr.bf16.gmra.mxu0 %v1464
        %v1781 = vpop.f32.mrf.mxu0
        %v1782 = vadd.f32 %v1609, %v1781
        %v1783 = vpop.f32.mrf.mxu0
        %v1784 = vpop.f32.mrf.mxu0
        %v1785 = vadd.f32 %v1612, %v1784
        %v1786 = vpop.f32.mrf.mxu0
        %1787 = vmatprep.mubr.bf16.mxu0 0
        %1788 = vmatmul.mubr.bf16.gmra.mxu0 %v1466
        %v1789 = vpop.f32.mrf.mxu0
        %v1790 = vadd.f32 %v1617, %v1789
        %v1791 = vpop.f32.mrf.mxu0
        %v1792 = vpop.f32.mrf.mxu0
        %v1793 = vadd.f32 %v1620, %v1792
        %v1794 = vpop.f32.mrf.mxu0
        %1795 = vmatprep.mubr.bf16.mxu0 0
        %1796 = vmatmul.mubr.bf16.gmra.mxu0 %v1468
        %v1797 = vpop.f32.mrf.mxu0
        %v1798 = vadd.f32 %v1625, %v1797
        %v1799 = vpop.f32.mrf.mxu0
        %v1800 = vpop.f32.mrf.mxu0
        %v1801 = vadd.f32 %v1628, %v1800
        %v1802 = vpop.f32.mrf.mxu0
        %1803 = vmatprep.mubr.bf16.mxu0 0
        %1804 = vmatmul.mubr.bf16.gmra.mxu0 %v1470
        %v1805 = vpop.f32.mrf.mxu0
        %v1806 = vadd.f32 %v1633, %v1805
        %v1807 = vpop.f32.mrf.mxu0
        %v1808 = vpop.f32.mrf.mxu0
        %v1809 = vadd.f32 %v1636, %v1808
        %v1810 = vpop.f32.mrf.mxu0
        %1811 = vdwg.mxu0
        %v1813 = vshrl.u32 %v946, 16
        %v1815 = vshll.u32 %v946, 16
        %v1817 = vrot.slane %v1815, 1
        %v1818 = vor.u32 %v1813, %v1817
        %v1820 = vshll.u32 %v966, 16
        %v1822 = vrot.slane %v1820, 1
        %v1823 = vsel %vm977, %v1818, %v1822
        %v1825 = vshrl.u32 %v956, 16
        %v1827 = vshll.u32 %v956, 16
        %v1829 = vrot.slane %v1827, 1
        %v1830 = vor.u32 %v1825, %v1829
        %v1832 = vshll.u32 %v976, 16
        %v1834 = vrot.slane %v1832, 1
        %v1835 = vsel %vm977, %v1830, %v1834
        %1836 = vrot.lane.b32.xlu0 %v1823, 4
        %v1837 = vpop.permute.xlu0 %1836
        %1838 = vrot.lane.b32.xlu0 %v1835, 4
        %v1839 = vpop.permute.xlu0 %1838
        %v1844 = vrot.slane %v946, 1
        %v1845 = vrot.slane %v966, 1
        %v1846 = vsel %vm1234, %v1844, %v1845
        %v1847 = vrot.slane %v956, 1
        %v1848 = vrot.slane %v976, 1
        %v1849 = vsel %vm1234, %v1847, %v1848
        %1850 = vrot.lane.b32.xlu0 %v1846, 8
        %v1851 = vpop.permute.xlu0 %1850
        %1852 = vrot.lane.b32.xlu0 %v1849, 8
        %v1853 = vpop.permute.xlu0 %1852
        %v1855 = vsel %vm1315, %v946, %v1837
        %v1857 = vsel %vm1315, %v956, %v1839
        %v1859 = vsel %vm1348, %v1855, %v1851
        %v1861 = vsel %vm1348, %v1857, %v1853
        %s1862 = scalar_lea.vmem %s5, 16
        %v1863 = vld [vmem:[%s1862] sm:$0xf]
        %v1864 = vld [vmem:[%s1862 + $0x4] sm:$0x3]
        %v1867 = vunpack.c.l.b16 %v1863
        %v1868 = vunpack.c.l.b16 %v1864
        %v1869 = vpack.c.b16 %v1868, %v1867
        %v1870 = vsel %vm1441, %v1859, 0
        %v1872 = vsel %vm1441, %v1861, 0
        %v1875 = vsel %vm1474, %v1869, 0
        %1877 = vmatprep.subr.bf16.mxu0 0
        %1878 = vmatpush1.bf16.msra.mxu0 0
        %1879 = vmatprep.subr.bf16.mxu0 0
        %1880 = vmatpush1.bf16.msra.mxu0 0
        %1881 = vmatprep.subr.bf16.mxu0 0
        %1882 = vmatpush1.bf16.msra.mxu0 0
        %1883 = vmatprep.subr.bf16.mxu0 0
        %1884 = vmatpush1.bf16.msra.mxu0 0
        %1885 = vmatprep.subr.bf16.mxu0 0
        %1886 = vmatpush1.bf16.msra.mxu0 0
        %1887 = vmatprep.subr.bf16.mxu0 0
        %1888 = vmatpush1.bf16.msra.mxu0 0
        %1889 = vmatprep.subr.bf16.mxu0 0
        %1890 = vmatpush1.bf16.msra.mxu0 0
        %1891 = vmatprep.subr.bf16.mxu0 0
        %1892 = vmatpush1.bf16.msra.mxu0 %v1875
        %1893 = vmatprep.subr.bf16.mxu0 0
        %1894 = vmatpush2.bf16.msra.mxu0 0
        %1895 = vmatprep.subr.bf16.mxu0 0
        %1896 = vmatpush2.bf16.msra.mxu0 0
        %1897 = vmatprep.subr.bf16.mxu0 0
        %1898 = vmatpush2.bf16.msra.mxu0 0
        %1899 = vmatprep.subr.bf16.mxu0 0
        %1900 = vmatpush2.bf16.msra.mxu0 0
        %1901 = vmatprep.subr.bf16.mxu0 0
        %1902 = vmatpush2.bf16.msra.mxu0 0
        %1903 = vmatprep.subr.bf16.mxu0 0
        %1904 = vmatpush2.bf16.msra.mxu0 0
        %1905 = vmatprep.subr.bf16.mxu0 0
        %1906 = vmatpush2.bf16.msra.mxu0 0
        %1907 = vmatprep.subr.bf16.mxu0 0
        %1908 = vmatpush2.bf16.msra.mxu0 0
        %1909 = vmatprep.mubr.bf16.mxu0 0
        %1910 = vmatmul.mubr.bf16.gmra.mxu0 %v1444
        %v1911 = vpop.f32.mrf.mxu0
        %v1912 = vadd.f32 0.0, %v1911
        %v1913 = vpop.f32.mrf.mxu0
        %v1914 = vpop.f32.mrf.mxu0
        %v1915 = vadd.f32 0.0, %v1914
        %v1916 = vpop.f32.mrf.mxu0
        %1917 = vmatprep.mubr.bf16.mxu0 0
        %1918 = vmatmul.mubr.bf16.gmra.mxu0 %v1446
        %v1919 = vpop.f32.mrf.mxu0
        %v1920 = vadd.f32 0.0, %v1919
        %v1921 = vpop.f32.mrf.mxu0
        %v1922 = vpop.f32.mrf.mxu0
        %v1923 = vadd.f32 0.0, %v1922
        %v1924 = vpop.f32.mrf.mxu0
        %1925 = vmatprep.mubr.bf16.mxu0 0
        %1926 = vmatmul.mubr.bf16.gmra.mxu0 %v1448
        %v1927 = vpop.f32.mrf.mxu0
        %v1928 = vadd.f32 0.0, %v1927
        %v1929 = vpop.f32.mrf.mxu0
        %v1930 = vpop.f32.mrf.mxu0
        %v1931 = vadd.f32 0.0, %v1930
        %v1932 = vpop.f32.mrf.mxu0
        %1933 = vmatprep.mubr.bf16.mxu0 0
        %1934 = vmatmul.mubr.bf16.gmra.mxu0 %v1450
        %v1935 = vpop.f32.mrf.mxu0
        %v1936 = vadd.f32 0.0, %v1935
        %v1937 = vpop.f32.mrf.mxu0
        %v1938 = vpop.f32.mrf.mxu0
        %v1939 = vadd.f32 0.0, %v1938
        %v1940 = vpop.f32.mrf.mxu0
        %1941 = vmatprep.mubr.bf16.mxu0 0
        %1942 = vmatmul.mubr.bf16.gmra.mxu0 %v1452
        %v1943 = vpop.f32.mrf.mxu0
        %v1944 = vadd.f32 0.0, %v1943
        %v1945 = vpop.f32.mrf.mxu0
        %v1946 = vpop.f32.mrf.mxu0
        %v1947 = vadd.f32 0.0, %v1946
        %v1948 = vpop.f32.mrf.mxu0
        %1949 = vmatprep.mubr.bf16.mxu0 0
        %1950 = vmatmul.mubr.bf16.gmra.mxu0 %v1454
        %v1951 = vpop.f32.mrf.mxu0
        %v1952 = vadd.f32 0.0, %v1951
        %v1953 = vpop.f32.mrf.mxu0
        %v1954 = vpop.f32.mrf.mxu0
        %v1955 = vadd.f32 0.0, %v1954
        %v1956 = vpop.f32.mrf.mxu0
        %1957 = vmatprep.mubr.bf16.mxu0 0
        %1958 = vmatmul.mubr.bf16.gmra.mxu0 %v1456
        %v1959 = vpop.f32.mrf.mxu0
        %v1960 = vadd.f32 0.0, %v1959
        %v1961 = vpop.f32.mrf.mxu0
        %v1962 = vpop.f32.mrf.mxu0
        %v1963 = vadd.f32 0.0, %v1962
        %v1964 = vpop.f32.mrf.mxu0
        %1965 = vmatprep.mubr.bf16.mxu0 0
        %1966 = vmatmul.mubr.bf16.gmra.mxu0 %v1870
        %v1967 = vpop.f32.mrf.mxu0
        %v1968 = vadd.f32 0.0, %v1967
        %v1969 = vpop.f32.mrf.mxu0
        %v1970 = vpop.f32.mrf.mxu0
        %v1971 = vadd.f32 0.0, %v1970
        %v1972 = vpop.f32.mrf.mxu0
        %1973 = vmatprep.mubr.bf16.mxu0 0
        %1974 = vmatmul.mubr.bf16.gmra.mxu0 %v1460
        %v1975 = vpop.f32.mrf.mxu0
        %v1976 = vadd.f32 0.0, %v1975
        %v1977 = vpop.f32.mrf.mxu0
        %v1978 = vpop.f32.mrf.mxu0
        %v1979 = vadd.f32 0.0, %v1978
        %v1980 = vpop.f32.mrf.mxu0
        %1981 = vmatprep.mubr.bf16.mxu0 0
        %1982 = vmatmul.mubr.bf16.gmra.mxu0 %v1462
        %v1983 = vpop.f32.mrf.mxu0
        %v1984 = vadd.f32 0.0, %v1983
        %v1985 = vpop.f32.mrf.mxu0
        %v1986 = vpop.f32.mrf.mxu0
        %v1987 = vadd.f32 0.0, %v1986
        %v1988 = vpop.f32.mrf.mxu0
        %1989 = vmatprep.mubr.bf16.mxu0 0
        %1990 = vmatmul.mubr.bf16.gmra.mxu0 %v1464
        %v1991 = vpop.f32.mrf.mxu0
        %v1992 = vadd.f32 0.0, %v1991
        %v1993 = vpop.f32.mrf.mxu0
        %v1994 = vpop.f32.mrf.mxu0
        %v1995 = vadd.f32 0.0, %v1994
        %v1996 = vpop.f32.mrf.mxu0
        %1997 = vmatprep.mubr.bf16.mxu0 0
        %1998 = vmatmul.mubr.bf16.gmra.mxu0 %v1466
        %v1999 = vpop.f32.mrf.mxu0
        %v2000 = vadd.f32 0.0, %v1999
        %v2001 = vpop.f32.mrf.mxu0
        %v2002 = vpop.f32.mrf.mxu0
        %v2003 = vadd.f32 0.0, %v2002
        %v2004 = vpop.f32.mrf.mxu0
        %2005 = vmatprep.mubr.bf16.mxu0 0
        %2006 = vmatmul.mubr.bf16.gmra.mxu0 %v1468
        %v2007 = vpop.f32.mrf.mxu0
        %v2008 = vadd.f32 0.0, %v2007
        %v2009 = vpop.f32.mrf.mxu0
        %v2010 = vpop.f32.mrf.mxu0
        %v2011 = vadd.f32 0.0, %v2010
        %v2012 = vpop.f32.mrf.mxu0
        %2013 = vmatprep.mubr.bf16.mxu0 0
        %2014 = vmatmul.mubr.bf16.gmra.mxu0 %v1470
        %v2015 = vpop.f32.mrf.mxu0
        %v2016 = vadd.f32 0.0, %v2015
        %v2017 = vpop.f32.mrf.mxu0
        %v2018 = vpop.f32.mrf.mxu0
        %v2019 = vadd.f32 0.0, %v2018
        %v2020 = vpop.f32.mrf.mxu0
        %2021 = vmatprep.mubr.bf16.mxu0 0
        %2022 = vmatmul.mubr.bf16.gmra.mxu0 %v1472
        %v2023 = vpop.f32.mrf.mxu0
        %v2024 = vadd.f32 0.0, %v2023
        %v2025 = vpop.f32.mrf.mxu0
        %v2026 = vpop.f32.mrf.mxu0
        %v2027 = vadd.f32 0.0, %v2026
        %v2028 = vpop.f32.mrf.mxu0
        %2029 = vmatprep.mubr.bf16.mxu0 0
        %2030 = vmatmul.mubr.bf16.gmra.mxu0 %v1872
        %v2031 = vpop.f32.mrf.mxu0
        %v2032 = vadd.f32 0.0, %v2031
        %v2033 = vpop.f32.mrf.mxu0
        %v2034 = vpop.f32.mrf.mxu0
        %v2035 = vadd.f32 0.0, %v2034
        %v2036 = vpop.f32.mrf.mxu0
        %2037 = vdwg.mxu0
        %v2038 = vadd.f32 %v1686, %v1912
        %v2039 = vadd.f32 %v1689, %v1915
        %v2040 = vadd.f32 %v1694, %v1920
        %v2041 = vadd.f32 %v1697, %v1923
        %v2042 = vadd.f32 %v1702, %v1928
        %v2043 = vadd.f32 %v1705, %v1931
        %v2044 = vadd.f32 %v1710, %v1936
        %v2045 = vadd.f32 %v1713, %v1939
        %v2046 = vadd.f32 %v1718, %v1944
        %v2047 = vadd.f32 %v1721, %v1947
        %v2048 = vadd.f32 %v1726, %v1952
        %v2049 = vadd.f32 %v1729, %v1955
        %v2050 = vadd.f32 %v1734, %v1960
        %v2051 = vadd.f32 %v1737, %v1963
        %v2052 = vadd.f32 %v1742, %v1968
        %v2053 = vadd.f32 %v1745, %v1971
        %v2054 = vadd.f32 %v1750, %v1976
        %v2055 = vadd.f32 %v1753, %v1979
        %v2056 = vadd.f32 %v1758, %v1984
        %v2057 = vadd.f32 %v1761, %v1987
        %v2058 = vadd.f32 %v1766, %v1992
        %v2059 = vadd.f32 %v1769, %v1995
        %v2060 = vadd.f32 %v1774, %v2000
        %v2061 = vadd.f32 %v1777, %v2003
        %v2062 = vadd.f32 %v1782, %v2008
        %v2063 = vadd.f32 %v1785, %v2011
        %v2064 = vadd.f32 %v1790, %v2016
        %v2065 = vadd.f32 %v1793, %v2019
        %v2066 = vadd.f32 %v1798, %v2024
        %v2067 = vadd.f32 %v1801, %v2027
        %v2068 = vadd.f32 %v1806, %v2032
        %v2069 = vadd.f32 %v1809, %v2035
        %v2070 = vld [vmem:[%s6] sm:$0x1]
        %v2072 = vlaneseq
        %v2073 = vshrl.u32 %v2072, 7
        %v2074 = vsub.s32 0, %v2073
        %v2075 = vrot.slane %v2070, %v2074
        %v2077 = vadd.f32 %v2038, %v2075
        %v2078 = vadd.f32 %v2039, %v2075
        %v2079 = vadd.f32 %v2040, %v2075
        %v2080 = vadd.f32 %v2041, %v2075
        %v2081 = vadd.f32 %v2042, %v2075
        %v2082 = vadd.f32 %v2043, %v2075
        %v2083 = vadd.f32 %v2044, %v2075
        %v2084 = vadd.f32 %v2045, %v2075
        %v2085 = vadd.f32 %v2046, %v2075
        %v2086 = vadd.f32 %v2047, %v2075
        %v2087 = vadd.f32 %v2048, %v2075
        %v2088 = vadd.f32 %v2049, %v2075
        %v2089 = vadd.f32 %v2050, %v2075
        %v2090 = vadd.f32 %v2051, %v2075
        %v2091 = vadd.f32 %v2052, %v2075
        %v2092 = vadd.f32 %v2053, %v2075
        %v2093 = vadd.f32 %v2054, %v2075
        %v2094 = vadd.f32 %v2055, %v2075
        %v2095 = vadd.f32 %v2056, %v2075
        %v2096 = vadd.f32 %v2057, %v2075
        %v2097 = vadd.f32 %v2058, %v2075
        %v2098 = vadd.f32 %v2059, %v2075
        %v2099 = vadd.f32 %v2060, %v2075
        %v2100 = vadd.f32 %v2061, %v2075
        %v2101 = vadd.f32 %v2062, %v2075
        %v2102 = vadd.f32 %v2063, %v2075
        %v2103 = vadd.f32 %v2064, %v2075
        %v2104 = vadd.f32 %v2065, %v2075
        %v2105 = vadd.f32 %v2066, %v2075
        %v2106 = vadd.f32 %v2067, %v2075
        %v2107 = vadd.f32 %v2068, %v2075
        %v2108 = vadd.f32 %v2069, %v2075
        %v2109 = vpack.c.bf16 %v2078, %v2077
        %v2110 = vpack.c.bf16 %v2080, %v2079
        %v2111 = vpack.c.bf16 %v2082, %v2081
        %v2112 = vpack.c.bf16 %v2084, %v2083
        %v2113 = vpack.c.bf16 %v2086, %v2085
        %v2114 = vpack.c.bf16 %v2088, %v2087
        %v2115 = vpack.c.bf16 %v2090, %v2089
        %v2116 = vpack.c.bf16 %v2092, %v2091
        %v2117 = vpack.c.bf16 %v2094, %v2093
        %v2118 = vpack.c.bf16 %v2096, %v2095
        %v2119 = vpack.c.bf16 %v2098, %v2097
        %v2120 = vpack.c.bf16 %v2100, %v2099
        %v2121 = vpack.c.bf16 %v2102, %v2101
        %v2122 = vpack.c.bf16 %v2104, %v2103
        %v2123 = vpack.c.bf16 %v2106, %v2105
        %v2124 = vpack.c.bf16 %v2108, %v2107
        %v2141 = vunpack.c.l.b16 %v2109
        %v2142 = vunpack.c.h.b16 %v2109
        %v2143 = vunpack.c.l.b16 %v2110
        %v2144 = vunpack.c.h.b16 %v2110
        %v2145 = vunpack.c.l.b16 %v2111
        %v2146 = vunpack.c.h.b16 %v2111
        %v2147 = vunpack.c.l.b16 %v2112
        %v2148 = vunpack.c.h.b16 %v2112
        %v2149 = vunpack.c.l.b16 %v2113
        %v2150 = vunpack.c.h.b16 %v2113
        %v2151 = vunpack.c.l.b16 %v2114
        %v2152 = vunpack.c.h.b16 %v2114
        %v2153 = vunpack.c.l.b16 %v2115
        %v2154 = vunpack.c.h.b16 %v2115
        %v2155 = vunpack.c.l.b16 %v2116
        %v2156 = vunpack.c.h.b16 %v2116
        %v2157 = vunpack.c.l.b16 %v2117
        %v2158 = vunpack.c.h.b16 %v2117
        %v2159 = vunpack.c.l.b16 %v2118
        %v2160 = vunpack.c.h.b16 %v2118
        %v2161 = vunpack.c.l.b16 %v2119
        %v2162 = vunpack.c.h.b16 %v2119
        %v2163 = vunpack.c.l.b16 %v2120
        %v2164 = vunpack.c.h.b16 %v2120
        %v2165 = vunpack.c.l.b16 %v2121
        %v2166 = vunpack.c.h.b16 %v2121
        %v2167 = vunpack.c.l.b16 %v2122
        %v2168 = vunpack.c.h.b16 %v2122
        %v2169 = vunpack.c.l.b16 %v2123
        %v2170 = vunpack.c.h.b16 %v2123
        %v2171 = vunpack.c.l.b16 %v2124
        %v2172 = vunpack.c.h.b16 %v2124
        %v2173 = vpack.c.b16 %v2141, %v2141
        %v2174 = vpack.c.b16 %v2142, %v2142
        %v2175 = vpack.c.b16 %v2143, %v2143
        %v2176 = vpack.c.b16 %v2144, %v2144
        %v2177 = vpack.c.b16 %v2145, %v2145
        %v2178 = vpack.c.b16 %v2146, %v2146
        %v2179 = vpack.c.b16 %v2147, %v2147
        %v2180 = vpack.c.b16 %v2148, %v2148
        %v2181 = vpack.c.b16 %v2149, %v2149
        %v2182 = vpack.c.b16 %v2150, %v2150
        %v2183 = vpack.c.b16 %v2151, %v2151
        %v2184 = vpack.c.b16 %v2152, %v2152
        %v2185 = vpack.c.b16 %v2153, %v2153
        %v2186 = vpack.c.b16 %v2154, %v2154
        %v2187 = vpack.c.b16 %v2155, %v2155
        %v2188 = vpack.c.b16 %v2156, %v2156
        %v2189 = vpack.c.b16 %v2157, %v2157
        %v2190 = vpack.c.b16 %v2158, %v2158
        %v2191 = vpack.c.b16 %v2159, %v2159
        %v2192 = vpack.c.b16 %v2160, %v2160
        %v2193 = vpack.c.b16 %v2161, %v2161
        %v2194 = vpack.c.b16 %v2162, %v2162
        %v2195 = vpack.c.b16 %v2163, %v2163
        %v2196 = vpack.c.b16 %v2164, %v2164
        %v2197 = vpack.c.b16 %v2165, %v2165
        %v2198 = vpack.c.b16 %v2166, %v2166
        %v2199 = vpack.c.b16 %v2167, %v2167
        %v2200 = vpack.c.b16 %v2168, %v2168
        %v2201 = vpack.c.b16 %v2169, %v2169
        %v2202 = vpack.c.b16 %v2170, %v2170
        %v2203 = vpack.c.b16 %v2171, %v2171
        %v2204 = vpack.c.b16 %v2172, %v2172
        %vm2237 = vcmask 60416
        %2238 = vst.msk [vmem:[%s654] sm:$0xf] %vm2237, %v2173
        %2239 = vst.msk [vmem:[%s654 + $0x4] sm:$0xf] %vm2237, %v2174
        %2240 = vst.msk [vmem:[%s654 + $0x8] sm:$0xf] %vm2237, %v2175
        %2241 = vst.msk [vmem:[%s654 + $0xc] sm:$0xf] %vm2237, %v2176
        %2242 = vst.msk [vmem:[%s654 + $0x10] sm:$0xf] %vm2237, %v2177
        %2243 = vst.msk [vmem:[%s654 + $0x14] sm:$0xf] %vm2237, %v2178
        %2244 = vst.msk [vmem:[%s654 + $0x18] sm:$0xf] %vm2237, %v2179
        %2245 = vst.msk [vmem:[%s654 + $0x1c] sm:$0xf] %vm2237, %v2180
        %2246 = vst.msk [vmem:[%s654 + $0x20] sm:$0xf] %vm2237, %v2181
        %2247 = vst.msk [vmem:[%s654 + $0x24] sm:$0xf] %vm2237, %v2182
        %2248 = vst.msk [vmem:[%s654 + $0x28] sm:$0xf] %vm2237, %v2183
        %2249 = vst.msk [vmem:[%s654 + $0x2c] sm:$0xf] %vm2237, %v2184
        %2250 = vst.msk [vmem:[%s654 + $0x30] sm:$0xf] %vm2237, %v2185
        %2251 = vst.msk [vmem:[%s654 + $0x34] sm:$0xf] %vm2237, %v2186
        %2252 = vst.msk [vmem:[%s654 + $0x38] sm:$0xf] %vm2237, %v2187
        %2253 = vst.msk [vmem:[%s654 + $0x3c] sm:$0xf] %vm2237, %v2188
        %2254 = vst.msk [vmem:[%s654 + $0x40] sm:$0xf] %vm2237, %v2189
        %2255 = vst.msk [vmem:[%s654 + $0x44] sm:$0xf] %vm2237, %v2190
        %2256 = vst.msk [vmem:[%s654 + $0x48] sm:$0xf] %vm2237, %v2191
        %2257 = vst.msk [vmem:[%s654 + $0x4c] sm:$0xf] %vm2237, %v2192
        %2258 = vst.msk [vmem:[%s654 + $0x50] sm:$0xf] %vm2237, %v2193
        %2259 = vst.msk [vmem:[%s654 + $0x54] sm:$0xf] %vm2237, %v2194
        %2260 = vst.msk [vmem:[%s654 + $0x58] sm:$0xf] %vm2237, %v2195
        %2261 = vst.msk [vmem:[%s654 + $0x5c] sm:$0xf] %vm2237, %v2196
        %2262 = vst.msk [vmem:[%s654 + $0x60] sm:$0xf] %vm2237, %v2197
        %2263 = vst.msk [vmem:[%s654 + $0x64] sm:$0xf] %vm2237, %v2198
        %2264 = vst.msk [vmem:[%s654 + $0x68] sm:$0xf] %vm2237, %v2199
        %2265 = vst.msk [vmem:[%s654 + $0x6c] sm:$0xf] %vm2237, %v2200
        %2266 = vst.msk [vmem:[%s654 + $0x70] sm:$0xf] %vm2237, %v2201
        %2267 = vst.msk [vmem:[%s654 + $0x74] sm:$0xf] %vm2237, %v2202
        %2268 = vst.msk [vmem:[%s654 + $0x78] sm:$0xf] %vm2237, %v2203
        %2269 = vst.msk [vmem:[%s654 + $0x7c] sm:$0xf] %vm2237, %v2204
        %v2270 = vsel %vm1348, %v2077, 0.0
        %v2271 = vsel %vm1348, %v2078, 0.0
        %v2272 = vadd.f32 %v2270, %v2271
        %v2273 = vsel %vm1348, %v2079, 0.0
        %v2274 = vadd.f32 %v2272, %v2273
        %v2275 = vsel %vm1348, %v2080, 0.0
        %v2276 = vadd.f32 %v2274, %v2275
        %v2277 = vsel %vm1348, %v2081, 0.0
        %v2278 = vadd.f32 %v2276, %v2277
        %v2279 = vsel %vm1348, %v2082, 0.0
        %v2280 = vadd.f32 %v2278, %v2279
        %v2281 = vsel %vm1348, %v2083, 0.0
        %v2282 = vadd.f32 %v2280, %v2281
        %v2283 = vsel %vm1348, %v2084, 0.0
        %v2284 = vadd.f32 %v2282, %v2283
        %v2285 = vsel %vm1348, %v2085, 0.0
        %v2286 = vadd.f32 %v2284, %v2285
        %v2287 = vsel %vm1348, %v2086, 0.0
        %v2288 = vadd.f32 %v2286, %v2287
        %v2289 = vsel %vm1348, %v2087, 0.0
        %v2290 = vadd.f32 %v2288, %v2289
        %v2291 = vsel %vm1348, %v2088, 0.0
        %v2292 = vadd.f32 %v2290, %v2291
        %v2293 = vsel %vm1348, %v2089, 0.0
        %v2294 = vadd.f32 %v2292, %v2293
        %v2295 = vsel %vm1348, %v2090, 0.0
        %v2296 = vadd.f32 %v2294, %v2295
        %v2297 = vsel %vm1348, %v2091, 0.0
        %v2298 = vadd.f32 %v2296, %v2297
        %v2299 = vsel %vm1348, %v2092, 0.0
        %v2300 = vadd.f32 %v2298, %v2299
        %v2301 = vsel %vm1348, %v2093, 0.0
        %v2302 = vadd.f32 %v2300, %v2301
        %v2303 = vsel %vm1348, %v2094, 0.0
        %v2304 = vadd.f32 %v2302, %v2303
        %v2305 = vsel %vm1348, %v2095, 0.0
        %v2306 = vadd.f32 %v2304, %v2305
        %v2307 = vsel %vm1348, %v2096, 0.0
        %v2308 = vadd.f32 %v2306, %v2307
        %v2309 = vsel %vm1348, %v2097, 0.0
        %v2310 = vadd.f32 %v2308, %v2309
        %v2311 = vsel %vm1348, %v2098, 0.0
        %v2312 = vadd.f32 %v2310, %v2311
        %v2313 = vsel %vm1348, %v2099, 0.0
        %v2314 = vadd.f32 %v2312, %v2313
        %v2315 = vsel %vm1348, %v2100, 0.0
        %v2316 = vadd.f32 %v2314, %v2315
        %v2317 = vsel %vm1348, %v2101, 0.0
        %v2318 = vadd.f32 %v2316, %v2317
        %v2319 = vsel %vm1348, %v2102, 0.0
        %v2320 = vadd.f32 %v2318, %v2319
        %v2321 = vsel %vm1348, %v2103, 0.0
        %v2322 = vadd.f32 %v2320, %v2321
        %v2323 = vsel %vm1348, %v2104, 0.0
        %v2324 = vadd.f32 %v2322, %v2323
        %v2325 = vsel %vm1348, %v2105, 0.0
        %v2326 = vadd.f32 %v2324, %v2325
        %v2327 = vsel %vm1348, %v2106, 0.0
        %v2328 = vadd.f32 %v2326, %v2327
        %v2329 = vsel %vm1348, %v2107, 0.0
        %v2330 = vadd.f32 %v2328, %v2329
        %v2331 = vsel %vm1348, %v2108, 0.0
        %v2332 = vadd.f32 %v2330, %v2331
        %v2333 = vrot.slane %v2332, 4
        %v2334 = vadd.f32 %v2332, %v2333
        %v2335 = vrot.slane %v2334, 2
        %v2336 = vadd.f32 %v2334, %v2335
        %v2337 = vrot.slane %v2336, 1
        %v2338 = vadd.f32 %v2336, %v2337
        %vm2339 = vcmask 57344
        %2340 = vst.msk [vmem:[%s660] sm:$0x1] %vm2339, %v2338
        %v2341 = vmul.f32 %v2077, %v2077
        %v2342 = vmul.f32 %v2078, %v2078
        %v2343 = vmul.f32 %v2079, %v2079
        %v2344 = vmul.f32 %v2080, %v2080
        %v2345 = vmul.f32 %v2081, %v2081
        %v2346 = vmul.f32 %v2082, %v2082
        %v2347 = vmul.f32 %v2083, %v2083
        %v2348 = vmul.f32 %v2084, %v2084
        %v2349 = vmul.f32 %v2085, %v2085
        %v2350 = vmul.f32 %v2086, %v2086
        %v2351 = vmul.f32 %v2087, %v2087
        %v2352 = vmul.f32 %v2088, %v2088
        %v2353 = vmul.f32 %v2089, %v2089
        %v2354 = vmul.f32 %v2090, %v2090
        %v2355 = vmul.f32 %v2091, %v2091
        %v2356 = vmul.f32 %v2092, %v2092
        %v2357 = vmul.f32 %v2093, %v2093
        %v2358 = vmul.f32 %v2094, %v2094
        %v2359 = vmul.f32 %v2095, %v2095
        %v2360 = vmul.f32 %v2096, %v2096
        %v2361 = vmul.f32 %v2097, %v2097
        %v2362 = vmul.f32 %v2098, %v2098
        %v2363 = vmul.f32 %v2099, %v2099
        %v2364 = vmul.f32 %v2100, %v2100
        %v2365 = vmul.f32 %v2101, %v2101
        %v2366 = vmul.f32 %v2102, %v2102
        %v2367 = vmul.f32 %v2103, %v2103
        %v2368 = vmul.f32 %v2104, %v2104
        %v2369 = vmul.f32 %v2105, %v2105
        %v2370 = vmul.f32 %v2106, %v2106
        %v2371 = vmul.f32 %v2107, %v2107
        %v2372 = vmul.f32 %v2108, %v2108
        %v2373 = vsel %vm1348, %v2341, 0.0
        %v2374 = vsel %vm1348, %v2342, 0.0
        %v2375 = vadd.f32 %v2373, %v2374
        %v2376 = vsel %vm1348, %v2343, 0.0
        %v2377 = vadd.f32 %v2375, %v2376
        %v2378 = vsel %vm1348, %v2344, 0.0
        %v2379 = vadd.f32 %v2377, %v2378
        %v2380 = vsel %vm1348, %v2345, 0.0
        %v2381 = vadd.f32 %v2379, %v2380
        %v2382 = vsel %vm1348, %v2346, 0.0
        %v2383 = vadd.f32 %v2381, %v2382
        %v2384 = vsel %vm1348, %v2347, 0.0
        %v2385 = vadd.f32 %v2383, %v2384
        %v2386 = vsel %vm1348, %v2348, 0.0
        %v2387 = vadd.f32 %v2385, %v2386
        %v2388 = vsel %vm1348, %v2349, 0.0
        %v2389 = vadd.f32 %v2387, %v2388
        %v2390 = vsel %vm1348, %v2350, 0.0
        %v2391 = vadd.f32 %v2389, %v2390
        %v2392 = vsel %vm1348, %v2351, 0.0
        %v2393 = vadd.f32 %v2391, %v2392
        %v2394 = vsel %vm1348, %v2352, 0.0
        %v2395 = vadd.f32 %v2393, %v2394
        %v2396 = vsel %vm1348, %v2353, 0.0
        %v2397 = vadd.f32 %v2395, %v2396
        %v2398 = vsel %vm1348, %v2354, 0.0
        %v2399 = vadd.f32 %v2397, %v2398
        %v2400 = vsel %vm1348, %v2355, 0.0
        %v2401 = vadd.f32 %v2399, %v2400
        %v2402 = vsel %vm1348, %v2356, 0.0
        %v2403 = vadd.f32 %v2401, %v2402
        %v2404 = vsel %vm1348, %v2357, 0.0
        %v2405 = vadd.f32 %v2403, %v2404
        %v2406 = vsel %vm1348, %v2358, 0.0
        %v2407 = vadd.f32 %v2405, %v2406
        %v2408 = vsel %vm1348, %v2359, 0.0
        %v2409 = vadd.f32 %v2407, %v2408
        %v2410 = vsel %vm1348, %v2360, 0.0
        %v2411 = vadd.f32 %v2409, %v2410
        %v2412 = vsel %vm1348, %v2361, 0.0
        %v2413 = vadd.f32 %v2411, %v2412
        %v2414 = vsel %vm1348, %v2362, 0.0
        %v2415 = vadd.f32 %v2413, %v2414
        %v2416 = vsel %vm1348, %v2363, 0.0
        %v2417 = vadd.f32 %v2415, %v2416
        %v2418 = vsel %vm1348, %v2364, 0.0
        %v2419 = vadd.f32 %v2417, %v2418
        %v2420 = vsel %vm1348, %v2365, 0.0
        %v2421 = vadd.f32 %v2419, %v2420
        %v2422 = vsel %vm1348, %v2366, 0.0
        %v2423 = vadd.f32 %v2421, %v2422
        %v2424 = vsel %vm1348, %v2367, 0.0
        %v2425 = vadd.f32 %v2423, %v2424
        %v2426 = vsel %vm1348, %v2368, 0.0
        %v2427 = vadd.f32 %v2425, %v2426
        %v2428 = vsel %vm1348, %v2369, 0.0
        %v2429 = vadd.f32 %v2427, %v2428
        %v2430 = vsel %vm1348, %v2370, 0.0
        %v2431 = vadd.f32 %v2429, %v2430
        %v2432 = vsel %vm1348, %v2371, 0.0
        %v2433 = vadd.f32 %v2431, %v2432
        %v2434 = vsel %vm1348, %v2372, 0.0
        %v2435 = vadd.f32 %v2433, %v2434
        %v2436 = vrot.slane %v2435, 4
        %v2437 = vadd.f32 %v2435, %v2436
        %v2438 = vrot.slane %v2437, 2
        %v2439 = vadd.f32 %v2437, %v2438
        %v2440 = vrot.slane %v2439, 1
        %v2441 = vadd.f32 %v2439, %v2440
        %2442 = vst.msk [vmem:[%s666] sm:$0x1] %vm2339, %v2441
        %s2443 = sand.u32 %s213, 1
        %s2444 = sand.u32 %s213, 1
        %s2445 = smul.addr %s2444, 128
        %s2446 = scalar_lea.vmem [#allocation5], %s2445
        %s2447 = sand.u32 %s239, 1
        %s2448 = scalar_lea.sflag [#allocation7], %s2447
        %s2449 = sand.u32 %s239, 1
        %s2450 = scalar_lea.vmem [#allocation6], %s2449
        %s2451 = sand.u32 %s265, 1
        %s2452 = scalar_lea.sflag [#allocation9], %s2451
        %s2453 = sand.u32 %s265, 1
        %s2454 = scalar_lea.vmem [#allocation8], %s2453
        // Predicated region
        $region163: #{tpu_custom_call.1} parent=149 // pred_check
          %p2455 = pneg %p223
        $region164: #{tpu_custom_call.1} parent=149 // pred_check_branch
          %2457 = sbr.rel (%p2455) target = $region166
        $region165: #{tpu_custom_call.1} parent=149 // pred_region
          %s2458 = smul.u32 8, %s27
          %s2459 = smul.addr %s2458, 2
          %s2460 = smul.addr %s2459, 4
          %s2461 = scalar_lea.vmem %s7, %s2460
          // Predicated region
          $region167: #{tpu_custom_call.1} parent=165 // pred_check
            _
          $region168: #{tpu_custom_call.1} parent=165 // pred_check_branch
            %2463 = sbr.rel (0) target = $region170
          $region169: #{tpu_custom_call.1} parent=165 // pred_region
            // Predicated region
            $region171: #{tpu_custom_call.1} parent=169 // pred_check
              _
            $region172: #{tpu_custom_call.1} parent=169 // pred_check_branch
              %2465 = sbr.rel target = $region174
            $region173: #{tpu_custom_call.1} parent=169 // pred_region
              // Predicated region
              $region186: #{tpu_custom_call.1} parent=173 // pred_check
                _
              $region187: #{tpu_custom_call.1} parent=173 // pred_check_branch
                %2543 = sbr.rel (0) target = $region189
              $region188: #{tpu_custom_call.1} parent=173 // pred_region
                loop: start=0, step=1, limit=1
                $region190: #{tpu_custom_call.1} parent=188 // loop_pre_header
                  _
                $region191: #{tpu_custom_call.1} parent=188 // loop_header
                  %s2545 = sphi 0, %s2549
                  %p2546 = scmp.ge.s32.totalorder %s2545, 1
                  %s2550 = sphi %s2446, %s2446
                  %s2551 = sphi %s2461, %s2461
                $region192: #{tpu_custom_call.1} parent=188 // loop_header_branch
                  %2548 = sbr.rel (%p2546) target = $region196
                $region193: #{tpu_custom_call.1} parent=188 // loop_body
                  _
                $region194: #{tpu_custom_call.1} parent=188 // loop_footer
                  %s2549 = sadd.s32 1, %s2545
                $region195: #{tpu_custom_call.1} parent=188 // loop_footer_branch
                  %2544 = sbr.rel target = $region191
                $region196: #{tpu_custom_call.1} parent=188 // loop_exit
                  _
                %s2553 = ssub.s32 16, 1
                loop: start=0, step=1, limit=1
                $region197: #{tpu_custom_call.1} parent=188 // loop_pre_header
                  _
                $region198: #{tpu_custom_call.1} parent=188 // loop_header
                  %s2555 = sphi 0, %s2559
                  %p2556 = scmp.ge.s32.totalorder %s2555, 1
                  %s2560 = sphi %s2446, %s2446
                  %s2561 = sphi %s2461, %s2461
                $region199: #{tpu_custom_call.1} parent=188 // loop_header_branch
                  %2558 = sbr.rel (%p2556) target = $region203
                $region200: #{tpu_custom_call.1} parent=188 // loop_body
                  %v2562 = vld [vmem:[%s2560] sm:%s2553]
                  %2563 = vst [vmem:[%s2561] sm:%s2553] %v2562
                  %v2564 = vld [vmem:[%s2560 + $0x4] sm:%s2553]
                  %2565 = vst [vmem:[%s2561 + $0x4] sm:%s2553] %v2564
                  %v2566 = vld [vmem:[%s2560 + $0x8] sm:%s2553]
                  %2567 = vst [vmem:[%s2561 + $0x8] sm:%s2553] %v2566
                  %v2568 = vld [vmem:[%s2560 + $0xc] sm:%s2553]
                  %2569 = vst [vmem:[%s2561 + $0xc] sm:%s2553] %v2568
                  %v2570 = vld [vmem:[%s2560 + $0x10] sm:%s2553]
                  %2571 = vst [vmem:[%s2561 + $0x10] sm:%s2553] %v2570
                  %v2572 = vld [vmem:[%s2560 + $0x14] sm:%s2553]
                  %2573 = vst [vmem:[%s2561 + $0x14] sm:%s2553] %v2572
                  %v2574 = vld [vmem:[%s2560 + $0x18] sm:%s2553]
                  %2575 = vst [vmem:[%s2561 + $0x18] sm:%s2553] %v2574
                  %v2576 = vld [vmem:[%s2560 + $0x1c] sm:%s2553]
                  %2577 = vst [vmem:[%s2561 + $0x1c] sm:%s2553] %v2576
                  %v2578 = vld [vmem:[%s2560 + $0x20] sm:%s2553]
                  %2579 = vst [vmem:[%s2561 + $0x20] sm:%s2553] %v2578
                  %v2580 = vld [vmem:[%s2560 + $0x24] sm:%s2553]
                  %2581 = vst [vmem:[%s2561 + $0x24] sm:%s2553] %v2580
                  %v2582 = vld [vmem:[%s2560 + $0x28] sm:%s2553]
                  %2583 = vst [vmem:[%s2561 + $0x28] sm:%s2553] %v2582
                  %v2584 = vld [vmem:[%s2560 + $0x2c] sm:%s2553]
                  %2585 = vst [vmem:[%s2561 + $0x2c] sm:%s2553] %v2584
                  %v2586 = vld [vmem:[%s2560 + $0x30] sm:%s2553]
                  %2587 = vst [vmem:[%s2561 + $0x30] sm:%s2553] %v2586
                  %v2588 = vld [vmem:[%s2560 + $0x34] sm:%s2553]
                  %2589 = vst [vmem:[%s2561 + $0x34] sm:%s2553] %v2588
                  %v2590 = vld [vmem:[%s2560 + $0x38] sm:%s2553]
                  %2591 = vst [vmem:[%s2561 + $0x38] sm:%s2553] %v2590
                  %v2592 = vld [vmem:[%s2560 + $0x3c] sm:%s2553]
                  %2593 = vst [vmem:[%s2561 + $0x3c] sm:%s2553] %v2592
                  %v2594 = vld [vmem:[%s2560 + $0x40] sm:%s2553]
                  %2595 = vst [vmem:[%s2561 + $0x80] sm:%s2553] %v2594
                  %v2596 = vld [vmem:[%s2560 + $0x44] sm:%s2553]
                  %2597 = vst [vmem:[%s2561 + $0x84] sm:%s2553] %v2596
                  %v2598 = vld [vmem:[%s2560 + $0x48] sm:%s2553]
                  %2599 = vst [vmem:[%s2561 + $0x88] sm:%s2553] %v2598
                  %v2600 = vld [vmem:[%s2560 + $0x4c] sm:%s2553]
                  %2601 = vst [vmem:[%s2561 + $0x8c] sm:%s2553] %v2600
                  %v2602 = vld [vmem:[%s2560 + $0x50] sm:%s2553]
                  %2603 = vst [vmem:[%s2561 + $0x90] sm:%s2553] %v2602
                  %v2604 = vld [vmem:[%s2560 + $0x54] sm:%s2553]
                  %2605 = vst [vmem:[%s2561 + $0x94] sm:%s2553] %v2604
                  %v2606 = vld [vmem:[%s2560 + $0x58] sm:%s2553]
                  %2607 = vst [vmem:[%s2561 + $0x98] sm:%s2553] %v2606
                  %v2608 = vld [vmem:[%s2560 + $0x5c] sm:%s2553]
                  %2609 = vst [vmem:[%s2561 + $0x9c] sm:%s2553] %v2608
                  %v2610 = vld [vmem:[%s2560 + $0x60] sm:%s2553]
                  %2611 = vst [vmem:[%s2561 + $0xa0] sm:%s2553] %v2610
                  %v2612 = vld [vmem:[%s2560 + $0x64] sm:%s2553]
                  %2613 = vst [vmem:[%s2561 + $0xa4] sm:%s2553] %v2612
                  %v2614 = vld [vmem:[%s2560 + $0x68] sm:%s2553]
                  %2615 = vst [vmem:[%s2561 + $0xa8] sm:%s2553] %v2614
                  %v2616 = vld [vmem:[%s2560 + $0x6c] sm:%s2553]
                  %2617 = vst [vmem:[%s2561 + $0xac] sm:%s2553] %v2616
                  %v2618 = vld [vmem:[%s2560 + $0x70] sm:%s2553]
                  %2619 = vst [vmem:[%s2561 + $0xb0] sm:%s2553] %v2618
                  %v2620 = vld [vmem:[%s2560 + $0x74] sm:%s2553]
                  %2621 = vst [vmem:[%s2561 + $0xb4] sm:%s2553] %v2620
                  %v2622 = vld [vmem:[%s2560 + $0x78] sm:%s2553]
                  %2623 = vst [vmem:[%s2561 + $0xb8] sm:%s2553] %v2622
                  %v2624 = vld [vmem:[%s2560 + $0x7c] sm:%s2553]
                  %2625 = vst [vmem:[%s2561 + $0xbc] sm:%s2553] %v2624
                $region201: #{tpu_custom_call.1} parent=188 // loop_footer
                  %s2559 = sadd.s32 1, %s2555
                $region202: #{tpu_custom_call.1} parent=188 // loop_footer_branch
                  %2554 = sbr.rel target = $region198
                $region203: #{tpu_custom_call.1} parent=188 // loop_exit
                  _
              $region189: #{tpu_custom_call.1} parent=173 // pred_fallthru
                _
            $region174: #{tpu_custom_call.1} parent=169 // pred_fallthru
              _
            // Predicated region
            $region175: #{tpu_custom_call.1} parent=169 // pred_check
              _
            $region176: #{tpu_custom_call.1} parent=169 // pred_check_branch
              %2467 = sbr.rel (0) target = $region178
            $region177: #{tpu_custom_call.1} parent=169 // pred_region
              %s2469 = ssub.s32 16, 1
              loop: start=0, step=1, limit=1
              $region179: #{tpu_custom_call.1} parent=177 // loop_pre_header
                _
              $region180: #{tpu_custom_call.1} parent=177 // loop_header
                %s2471 = sphi 0, %s2475
                %p2472 = scmp.ge.s32.totalorder %s2471, 1
                %s2476 = sphi %s2446, %s2446
                %s2477 = sphi %s2461, %s2461
              $region181: #{tpu_custom_call.1} parent=177 // loop_header_branch
                %2474 = sbr.rel (%p2472) target = $region185
              $region182: #{tpu_custom_call.1} parent=177 // loop_body
                %v2478 = vld [vmem:[%s2476] sm:%s2469]
                %2479 = vst [vmem:[%s2477] sm:%s2469] %v2478
                %v2480 = vld [vmem:[%s2476 + $0x4] sm:%s2469]
                %2481 = vst [vmem:[%s2477 + $0x4] sm:%s2469] %v2480
                %v2482 = vld [vmem:[%s2476 + $0x8] sm:%s2469]
                %2483 = vst [vmem:[%s2477 + $0x8] sm:%s2469] %v2482
                %v2484 = vld [vmem:[%s2476 + $0xc] sm:%s2469]
                %2485 = vst [vmem:[%s2477 + $0xc] sm:%s2469] %v2484
                %v2486 = vld [vmem:[%s2476 + $0x10] sm:%s2469]
                %2487 = vst [vmem:[%s2477 + $0x10] sm:%s2469] %v2486
                %v2488 = vld [vmem:[%s2476 + $0x14] sm:%s2469]
                %2489 = vst [vmem:[%s2477 + $0x14] sm:%s2469] %v2488
                %v2490 = vld [vmem:[%s2476 + $0x18] sm:%s2469]
                %2491 = vst [vmem:[%s2477 + $0x18] sm:%s2469] %v2490
                %v2492 = vld [vmem:[%s2476 + $0x1c] sm:%s2469]
                %2493 = vst [vmem:[%s2477 + $0x1c] sm:%s2469] %v2492
                %v2494 = vld [vmem:[%s2476 + $0x20] sm:%s2469]
                %2495 = vst [vmem:[%s2477 + $0x20] sm:%s2469] %v2494
                %v2496 = vld [vmem:[%s2476 + $0x24] sm:%s2469]
                %2497 = vst [vmem:[%s2477 + $0x24] sm:%s2469] %v2496
                %v2498 = vld [vmem:[%s2476 + $0x28] sm:%s2469]
                %2499 = vst [vmem:[%s2477 + $0x28] sm:%s2469] %v2498
                %v2500 = vld [vmem:[%s2476 + $0x2c] sm:%s2469]
                %2501 = vst [vmem:[%s2477 + $0x2c] sm:%s2469] %v2500
                %v2502 = vld [vmem:[%s2476 + $0x30] sm:%s2469]
                %2503 = vst [vmem:[%s2477 + $0x30] sm:%s2469] %v2502
                %v2504 = vld [vmem:[%s2476 + $0x34] sm:%s2469]
                %2505 = vst [vmem:[%s2477 + $0x34] sm:%s2469] %v2504
                %v2506 = vld [vmem:[%s2476 + $0x38] sm:%s2469]
                %2507 = vst [vmem:[%s2477 + $0x38] sm:%s2469] %v2506
                %v2508 = vld [vmem:[%s2476 + $0x3c] sm:%s2469]
                %2509 = vst [vmem:[%s2477 + $0x3c] sm:%s2469] %v2508
                %v2510 = vld [vmem:[%s2476 + $0x40] sm:%s2469]
                %2511 = vst [vmem:[%s2477 + $0x80] sm:%s2469] %v2510
                %v2512 = vld [vmem:[%s2476 + $0x44] sm:%s2469]
                %2513 = vst [vmem:[%s2477 + $0x84] sm:%s2469] %v2512
                %v2514 = vld [vmem:[%s2476 + $0x48] sm:%s2469]
                %2515 = vst [vmem:[%s2477 + $0x88] sm:%s2469] %v2514
                %v2516 = vld [vmem:[%s2476 + $0x4c] sm:%s2469]
                %2517 = vst [vmem:[%s2477 + $0x8c] sm:%s2469] %v2516
                %v2518 = vld [vmem:[%s2476 + $0x50] sm:%s2469]
                %2519 = vst [vmem:[%s2477 + $0x90] sm:%s2469] %v2518
                %v2520 = vld [vmem:[%s2476 + $0x54] sm:%s2469]
                %2521 = vst [vmem:[%s2477 + $0x94] sm:%s2469] %v2520
                %v2522 = vld [vmem:[%s2476 + $0x58] sm:%s2469]
                %2523 = vst [vmem:[%s2477 + $0x98] sm:%s2469] %v2522
                %v2524 = vld [vmem:[%s2476 + $0x5c] sm:%s2469]
                %2525 = vst [vmem:[%s2477 + $0x9c] sm:%s2469] %v2524
                %v2526 = vld [vmem:[%s2476 + $0x60] sm:%s2469]
                %2527 = vst [vmem:[%s2477 + $0xa0] sm:%s2469] %v2526
                %v2528 = vld [vmem:[%s2476 + $0x64] sm:%s2469]
                %2529 = vst [vmem:[%s2477 + $0xa4] sm:%s2469] %v2528
                %v2530 = vld [vmem:[%s2476 + $0x68] sm:%s2469]
                %2531 = vst [vmem:[%s2477 + $0xa8] sm:%s2469] %v2530
                %v2532 = vld [vmem:[%s2476 + $0x6c] sm:%s2469]
                %2533 = vst [vmem:[%s2477 + $0xac] sm:%s2469] %v2532
                %v2534 = vld [vmem:[%s2476 + $0x70] sm:%s2469]
                %2535 = vst [vmem:[%s2477 + $0xb0] sm:%s2469] %v2534
                %v2536 = vld [vmem:[%s2476 + $0x74] sm:%s2469]
                %2537 = vst [vmem:[%s2477 + $0xb4] sm:%s2469] %v2536
                %v2538 = vld [vmem:[%s2476 + $0x78] sm:%s2469]
                %2539 = vst [vmem:[%s2477 + $0xb8] sm:%s2469] %v2538
                %v2540 = vld [vmem:[%s2476 + $0x7c] sm:%s2469]
                %2541 = vst [vmem:[%s2477 + $0xbc] sm:%s2469] %v2540
              $region183: #{tpu_custom_call.1} parent=177 // loop_footer
                %s2475 = sadd.s32 1, %s2471
              $region184: #{tpu_custom_call.1} parent=177 // loop_footer_branch
                %2470 = sbr.rel target = $region180
              $region185: #{tpu_custom_call.1} parent=177 // loop_exit
                _
            $region178: #{tpu_custom_call.1} parent=169 // pred_fallthru
              _
          $region170: #{tpu_custom_call.1} parent=165 // pred_fallthru
            _
          %2626 = vnop
        $region166: #{tpu_custom_call.1} parent=149 // pred_fallthru
          _
        // Predicated region
        $region204: #{tpu_custom_call.1} parent=149 // pred_check
          %p2627 = pneg %p249
        $region205: #{tpu_custom_call.1} parent=149 // pred_check_branch
          %2629 = sbr.rel (%p2627) target = $region207
        $region206: #{tpu_custom_call.1} parent=149 // pred_region
          %s2631 = ssub.s32 16, 16
          %2632 = vsyncadd %s2448, %s2631
          %s2633 = smul.addr %s27, 16
          %s2634 = scalar_lea.hbm %s8, %s2633
          %s2636 = sshll.u32 %s2450, 4
          %s2637 = int_to_ptr.vmem [resolvable:$true] %s2636
          %2639 = dma.vmem_to_hbm [thread:$0]  %s2637, 16, %s2634, %s2448
        $region207: #{tpu_custom_call.1} parent=149 // pred_fallthru
          _
        // Predicated region
        $region208: #{tpu_custom_call.1} parent=149 // pred_check
          %p2640 = pneg %p275
        $region209: #{tpu_custom_call.1} parent=149 // pred_check_branch
          %2642 = sbr.rel (%p2640) target = $region211
        $region210: #{tpu_custom_call.1} parent=149 // pred_region
          %s2644 = ssub.s32 16, 16
          %2645 = vsyncadd %s2452, %s2644
          %s2646 = smul.addr %s27, 16
          %s2647 = scalar_lea.hbm %s9, %s2646
          %s2649 = sshll.u32 %s2454, 4
          %s2650 = int_to_ptr.vmem [resolvable:$true] %s2649
          %2652 = dma.vmem_to_hbm [thread:$0]  %s2650, 16, %s2647, %s2452
        $region211: #{tpu_custom_call.1} parent=149 // pred_fallthru
          _
      $region150: #{tpu_custom_call.1} parent=5 // pred_fallthru
        _
      %p2653 = scmp.le.s32.totalorder 2, %s22
      // Predicated region
      $region212: #{tpu_custom_call.1} parent=5 // pred_check
        %p2654 = pneg %p2653
      $region213: #{tpu_custom_call.1} parent=5 // pred_check_branch
        %2656 = sbr.rel (%p2654) target = $region215
      $region214: #{tpu_custom_call.1} parent=5 // pred_region
        %s2657 = ssub.s32 %s22, 2
        // Predicated region
        $region216: #{tpu_custom_call.1} parent=214 // pred_check
          %p2658 = pneg %p229
        $region217: #{tpu_custom_call.1} parent=214 // pred_check_branch
          %2660 = sbr.rel (%p2658) target = $region219
        $region218: #{tpu_custom_call.1} parent=214 // pred_region
          %s2661 = sand.u32 %s214, 1
          %s2662 = sand.u32 %s214, 1
          %s2663 = smul.addr %s2662, 128
          %s2664 = scalar_lea.vmem [#allocation5], %s2663
        $region219: #{tpu_custom_call.1} parent=214 // pred_fallthru
          _
        // Predicated region
        $region220: #{tpu_custom_call.1} parent=214 // pred_check
          %p2665 = pneg %p255
        $region221: #{tpu_custom_call.1} parent=214 // pred_check_branch
          %2667 = sbr.rel (%p2665) target = $region223
        $region222: #{tpu_custom_call.1} parent=214 // pred_region
          %s2668 = sand.u32 %s240, 1
          %s2669 = scalar_lea.sflag [#allocation7], %s2668
          %s2670 = sand.u32 %s240, 1
          %s2671 = scalar_lea.vmem [#allocation6], %s2670
          %2672 = dma.done %s2669, 16
        $region223: #{tpu_custom_call.1} parent=214 // pred_fallthru
          _
        // Predicated region
        $region224: #{tpu_custom_call.1} parent=214 // pred_check
          %p2673 = pneg %p281
        $region225: #{tpu_custom_call.1} parent=214 // pred_check_branch
          %2675 = sbr.rel (%p2673) target = $region227
        $region226: #{tpu_custom_call.1} parent=214 // pred_region
          %s2676 = sand.u32 %s266, 1
          %s2677 = scalar_lea.sflag [#allocation9], %s2676
          %s2678 = sand.u32 %s266, 1
          %s2679 = scalar_lea.vmem [#allocation8], %s2678
          %2680 = dma.done %s2677, 16
        $region227: #{tpu_custom_call.1} parent=214 // pred_fallthru
          _
      $region215: #{tpu_custom_call.1} parent=5 // pred_fallthru
        _
    $region6: #{tpu_custom_call.1} parent=1 // loop_footer
      %s26 = sadd.s32 1, %s22
    $region7: #{tpu_custom_call.1} parent=1 // loop_footer_branch
      %21 = sbr.rel target = $region3
    $region8: #{tpu_custom_call.1} parent=1 // loop_exit
      _
    %2681 = vsyncpa [#allocation7], 1
    %s2682 = scalar_lea.sflag [#allocation7], 1
    %2683 = vsyncpa %s2682, 1
    %2684 = vsyncpa [#allocation9], 1
    %s2685 = scalar_lea.sflag [#allocation9], 1
    %2686 = vsyncpa %s2685, 1

</llo_original>
